<compile_context>
chip_gen: v7x
topology: tpu7x:2x2x1
jax: 0.10.0
libtpu: 0.0.40
codegen_flags: <defaults>
</compile_context>

<pallas_src>
import functools

import jax
import jax.numpy as jnp
from jax.experimental import pallas as pl
from jax.experimental.pallas import tpu as pltpu


def _round_up(x, m):
    return (x + m - 1) // m * m


def _skipgram_kernel(wt_ref, vt_ref, iw_ref, iv_ref, out_ref, *,
                     n_pos, n_total, chunk):
    """One grid step: gather + score + logsigmoid for `tile` rows.

    wt_ref, vt_ref : (d_pad, r_pad) bf16  -- VMEM-resident transposed tables.
    iw_ref, iv_ref : (1, tile)  int32     -- table row ids for this tile.
    out_ref        : (1, 8, 128) f32      -- per-tile partial sum (lane-dense).
    """
    r_pad = wt_ref.shape[1]
    tile = iw_ref.shape[1]
    tile_start = pl.program_id(0) * tile

    # Widen the small resident tables once per grid step; everything after the
    # bf16 VMEM read is f32 (keeps v5e, which has no bf16 VALU, happy).
    wt = wt_ref[...].astype(jnp.float32)                       # (d_pad, r_pad)
    vt = vt_ref[...].astype(jnp.float32)

    acc = jnp.zeros((1, chunk), jnp.float32)
    # Statically unrolled chunk loop (tile // chunk is small and static); keeps
    # live f32 temporaries at (r_pad, chunk) instead of (r_pad, tile).
    for c in range(tile // chunk):
        off = c * chunk                                        # static, 128-aligned
        iw = iw_ref[:, off:off + chunk]                        # (1, chunk) int32
        iv = iv_ref[:, off:off + chunk]

        rows = jax.lax.broadcasted_iota(jnp.int32, (r_pad, chunk), 0)
        oh_w = jnp.where(rows == iw, 1.0, 0.0)                 # (r_pad, chunk) one-hot
        oh_v = jnp.where(rows == iv, 1.0, 0.0)

        # Gather == one-hot matmul on the MXU; result is lane-dense:
        # batch rows on the 128-lane axis, emb dim on sublanes.
        w_g = jnp.dot(wt, oh_w, preferred_element_type=jnp.float32)   # (d_pad, chunk)
        v_g = jnp.dot(vt, oh_v, preferred_element_type=jnp.float32)

        score = jnp.sum(w_g * v_g, axis=0, keepdims=True)      # (1, chunk)
        score = jnp.clip(score, -10.0, 10.0)

        gidx = tile_start + off + jax.lax.broadcasted_iota(jnp.int32, (1, chunk), 1)
        # Sign fold derived from the global row index (no sign input stream);
        # clip is symmetric so this matches logsigmoid(-clip(s)) for negatives.
        z = jnp.where(gidx < n_pos, score, -score)
        ls = jnp.minimum(z, 0.0) - jnp.log1p(jnp.exp(-jnp.abs(z)))
        acc = acc + jnp.where(gidx < n_total, ls, 0.0)         # mask padded tail

    out_ref[...] = jnp.broadcast_to(jnp.sum(acc), out_ref.shape)


@functools.partial(jax.jit, static_argnames=("n_pos", "tile_n", "chunk"))
def skipgram_loss(w_table, v_table, idx_w, idx_v, *, n_pos, tile_n=8192, chunk=1024):
    """loss = -(sum logsig(clip(<w,v>)) over pos + sum logsig(-clip(<w,v>)) over neg)."""
    d_pad, r_pad = w_table.shape
    n_total = int(idx_w.shape[0])

    chunk = _round_up(chunk, 128)
    tile_n = _round_up(tile_n, chunk)
    n128 = _round_up(n_total, 128)
    # Always >= 2 grid steps so the "parallel" axis can shard across v7x's
    # two TensorCores (free on single-TC v5e/v6e).
    n_steps = max(2, pl.cdiv(n128, tile_n))
    tile = min(tile_n, _round_up(pl.cdiv(n128, n_steps), chunk))
    n_pad = n_steps * tile

    def pack_idx(idx):
        return jnp.pad(idx.astype(jnp.int32), (0, n_pad - n_total)).reshape(1, n_pad)

    kernel = functools.partial(_skipgram_kernel,
                               n_pos=n_pos, n_total=n_total, chunk=chunk)

    # Explicit VMEM budget (v5e's scoped default is only 16 MiB): resident
    # bf16 tables, double-buffered int32 index tiles, gather temporaries.
    vmem_limit = int(min(
        48 * 1024 * 1024,
        4 * d_pad * r_pad * 2            # both bf16 tables, 2 buffers each
        + 2 * 2 * tile * 4               # two int32 index streams, double-buffered
        + 16 * r_pad * chunk             # one-hot / gathered f32 temporaries
        + 8 * 1024 * 1024))              # headroom

    partials = pl.pallas_call(
        kernel,
        out_shape=jax.ShapeDtypeStruct((n_steps, 8, 128), jnp.float32),
        grid_spec=pltpu.PrefetchScalarGridSpec(
            num_scalar_prefetch=0,
            grid=(n_steps,),
            in_specs=[
                pl.BlockSpec((d_pad, r_pad), lambda i: (0, 0)),   # W^T, VMEM-resident
                pl.BlockSpec((d_pad, r_pad), lambda i: (0, 0)),   # V^T, VMEM-resident
                pl.BlockSpec((1, tile), lambda i: (0, i)),        # w row ids
                pl.BlockSpec((1, tile), lambda i: (0, i)),        # v row ids
            ],
            out_specs=pl.BlockSpec((1, 8, 128), lambda i: (i, 0, 0)),
        ),
        compiler_params=pltpu.CompilerParams(
            dimension_semantics=("parallel",),
            vmem_limit_bytes=vmem_limit,
        ),
    )(w_table, v_table, pack_idx(idx_w), pack_idx(idx_v))

    # n_steps scalar partials; padded rows were already masked in-kernel.
    return -jnp.sum(partials[:, 0, 0])


class SkipGramModel:
    """JAX/Pallas port of the PyTorch SkipGramModel (forward pass only)."""

    def __init__(self, emb_size, emb_dimension, key):
        self.emb_size = emb_size
        self.emb_dimension = emb_dimension
        initrange = 0.5 / emb_dimension
        # w_embeddings ~ U(-initrange, initrange); v_embeddings init to 0
        # (matches the module's _init_emb, deterministic via PRNGKey).
        self.w_weight = jax.random.uniform(
            key, (2 * emb_size - 1, emb_dimension),
            dtype=jnp.float32, minval=-initrange, maxval=initrange)
        self.v_weight = jnp.zeros((2 * emb_size - 1, emb_dimension), jnp.float32)
        self.refresh_tables()

    def refresh_tables(self):
        """(Re)pack the embedding tables into the kernel's lane-dense bf16 layout.

        Done once per weight update (not per forward call), so the per-call XLA
        work is only the tiny int32 index concat/pad."""
        n_rows = 2 * self.emb_size - 1
        d_pad = _round_up(self.emb_dimension, 16)     # bf16 sublane packing
        r_pad = _round_up(n_rows, 128)                # table rows on the lane axis
        # TODO(synk): for very large vocabularies whose bf16 tables exceed VMEM
        # (esp. v7x's 64 MiB), fall back to an XLA-side / per-row-DMA gather.

        def pack(w):
            wt = jnp.transpose(w.astype(jnp.bfloat16))            # cast BEFORE transpose
            return jnp.pad(wt, ((0, d_pad - self.emb_dimension), (0, r_pad - n_rows)))

        self.w_table = pack(self.w_weight)            # (d_pad, r_pad) bf16
        self.v_table = pack(self.v_weight)            # (d_pad, r_pad) bf16

    def forward(self, pos_w, pos_v, neg_w, neg_v):
        pos_w = jnp.asarray(pos_w, dtype=jnp.int32)
        pos_v = jnp.asarray(pos_v, dtype=jnp.int32)
        neg_w = jnp.asarray(neg_w, dtype=jnp.int32)
        neg_v = jnp.asarray(neg_v, dtype=jnp.int32)
        idx_w = jnp.concatenate([pos_w, neg_w])
        idx_v = jnp.concatenate([pos_v, neg_v])
        return skipgram_loss(self.w_table, self.v_table, idx_w, idx_v,
                             n_pos=int(pos_w.shape[0]))


def reference_forward(model, pos_w, pos_v, neg_w, neg_v):
    """Pure-JAX f32 reference reproducing the PyTorch semantics."""
    emb_w = model.w_weight[jnp.asarray(pos_w)]
    neg_emb_w = model.w_weight[jnp.asarray(neg_w)]
    emb_v = model.v_weight[jnp.asarray(pos_v)]
    neg_emb_v = model.v_weight[jnp.asarray(neg_v)]

    score = jnp.sum(emb_w * emb_v, axis=1)
    score = jnp.clip(score, -10.0, 10.0)
    score = jax.nn.log_sigmoid(score)

    neg_score = jnp.sum(neg_emb_w * neg_emb_v, axis=1)
    neg_score = jnp.clip(neg_score, -10.0, 10.0)
    neg_score = jax.nn.log_sigmoid(-neg_score)

    return -(jnp.sum(score) + jnp.sum(neg_score))


if __name__ == "__main__":
    # Indices taken from the source file (Huffman-tree node ids).
    neg_v = [154, 155, 161, 171, 182]
    neg_w = [0, 0, 1, 1, 1]
    pos_v = [176, 187, 195, 184, 185]
    pos_w = [0, 0, 1, 1, 1]

    emb_size = 100            # vocabulary size -> embedding table of 2*100-1 rows
    emb_dimension = 32

    root = jax.random.PRNGKey(0)
    k_init, k_check = jax.random.split(root)

    # 1) Spec-faithful model (v table initialized to zero, as in _init_emb).
    model = SkipGramModel(emb_size, emb_dimension, k_init)
    loss = jax.block_until_ready(model.forward(pos_w, pos_v, neg_w, neg_v))
    ref = reference_forward(model, pos_w, pos_v, neg_w, neg_v)
    assert jnp.allclose(loss, ref, rtol=5e-3, atol=5e-3), (loss, ref)

    # 2) Non-trivial check: random v table so scores are non-zero (bf16-table
    #    kernel vs f32 reference, bf16-aware tolerance).
    model2 = SkipGramModel(emb_size, emb_dimension, k_init)
    model2.v_weight = jax.random.uniform(
        k_check, model2.v_weight.shape, dtype=jnp.float32, minval=-0.1, maxval=0.1)
    model2.refresh_tables()   # repack the kernel-side bf16 tables after the update
    loss2 = jax.block_until_ready(model2.forward(pos_w, pos_v, neg_w, neg_v))
    ref2 = reference_forward(model2, pos_w, pos_v, neg_w, neg_v)
    assert jnp.allclose(loss2, ref2, rtol=5e-3, atol=5e-3), (loss2, ref2)

    print("KERNEL_OK")
</pallas_src>

<mosaic_0001>
module attributes {stable_mosaic.version = 11 : i64} {
  func.func @_skipgram_kernel(%arg0: i32, %arg1: memref<32x256xbf16, #tpu.memory_space<vmem>>, %arg2: memref<32x256xbf16, #tpu.memory_space<vmem>>, %arg3: memref<1x1024xi32, #tpu.memory_space<vmem>>, %arg4: memref<1x1024xi32, #tpu.memory_space<vmem>>, %arg5: memref<1x8x128xf32, #tpu.memory_space<vmem>>) attributes {dimension_semantics = [#tpu.dimension_semantics<parallel>], iteration_bounds = array<i64: 2>, scalar_prefetch = 0 : i64, scratch_operands = 0 : i64, tpu.core_type = #tpu.core_type<tc>, window_params = [{pipeline_mode = #tpu.pipeline_mode<synchronous>, transform_indices = @transform_0, window_bounds = array<i64: 32, 256>}, {pipeline_mode = #tpu.pipeline_mode<synchronous>, transform_indices = @transform_1, window_bounds = array<i64: 32, 256>}, {transform_indices = @transform_2, window_bounds = array<i64: 1, 1024>}, {transform_indices = @transform_3, window_bounds = array<i64: 1, 1024>}, {transform_indices = @transform_4, window_bounds = array<i64: 1, 8, 128>}]} {
    %c1024_i32 = arith.constant 1024 : i32
    %0 = arith.muli %arg0, %c1024_i32 : i32
    %c0 = arith.constant 0 : index
    %c0_0 = arith.constant 0 : index
    %1 = vector.load %arg1[%c0, %c0_0] : memref<32x256xbf16, #tpu.memory_space<vmem>>, vector<32x256xbf16>
    %2 = arith.extf %1 : vector<32x256xbf16> to vector<32x256xf32>
    %c0_1 = arith.constant 0 : index
    %c0_2 = arith.constant 0 : index
    %3 = vector.load %arg2[%c0_1, %c0_2] : memref<32x256xbf16, #tpu.memory_space<vmem>>, vector<32x256xbf16>
    %4 = arith.extf %3 : vector<32x256xbf16> to vector<32x256xf32>
    %cst = arith.constant 0.000000e+00 : f32
    %5 = vector.broadcast %cst : f32 to vector<1x1024xf32>
    %c0_3 = arith.constant 0 : index
    %c0_4 = arith.constant 0 : index
    %6 = vector.load %arg3[%c0_3, %c0_4] : memref<1x1024xi32, #tpu.memory_space<vmem>>, vector<1x1024xi32>
    %c0_5 = arith.constant 0 : index
    %c0_6 = arith.constant 0 : index
    %7 = vector.load %arg4[%c0_5, %c0_6] : memref<1x1024xi32, #tpu.memory_space<vmem>>, vector<1x1024xi32>
    %8 = tpu.iota {dimensions = array<i32: 0>} : vector<256x1024xi32>
    %9 = vector.broadcast %6 : vector<1x1024xi32> to vector<256x1024xi32>
    %10 = arith.cmpi eq, %8, %9 : vector<256x1024xi32>
    %cst_7 = arith.constant 1.000000e+00 : f32
    %cst_8 = arith.constant 0.000000e+00 : f32
    %11 = vector.broadcast %cst_7 : f32 to vector<256x1024xf32>
    %12 = vector.broadcast %cst_8 : f32 to vector<256x1024xf32>
    %13 = arith.select %10, %11, %12 : vector<256x1024xi1>, vector<256x1024xf32>
    %14 = vector.broadcast %7 : vector<1x1024xi32> to vector<256x1024xi32>
    %15 = arith.cmpi eq, %8, %14 : vector<256x1024xi32>
    %cst_9 = arith.constant 1.000000e+00 : f32
    %cst_10 = arith.constant 0.000000e+00 : f32
    %16 = vector.broadcast %cst_9 : f32 to vector<256x1024xf32>
    %17 = vector.broadcast %cst_10 : f32 to vector<256x1024xf32>
    %18 = arith.select %15, %16, %17 : vector<256x1024xi1>, vector<256x1024xf32>
    %cst_11 = arith.constant dense<0.000000e+00> : vector<32x1024xf32>
    %19 = tpu.matmul %2, %13, %cst_11 {dimension_numbers = #tpu.dot_dimension_numbers<[1], [0], [0], [1], [0, 0, 1, 1], [], []>} : vector<32x256xf32>, vector<256x1024xf32>, vector<32x1024xf32> -> vector<32x1024xf32>
    %cst_12 = arith.constant dense<0.000000e+00> : vector<32x1024xf32>
    %20 = tpu.matmul %4, %18, %cst_12 {dimension_numbers = #tpu.dot_dimension_numbers<[1], [0], [0], [1], [0, 0, 1, 1], [], []>} : vector<32x256xf32>, vector<256x1024xf32>, vector<32x1024xf32> -> vector<32x1024xf32>
    %21 = arith.mulf %19, %20 : vector<32x1024xf32>
    %cst_13 = arith.constant dense<0.000000e+00> : vector<1024xf32>
    %22 = vector.multi_reduction <add>, %21, %cst_13 [0] : vector<32x1024xf32> to vector<1024xf32>
    %23 = vector.shape_cast %22 : vector<1024xf32> to vector<1x1024xf32>
    %cst_14 = arith.constant -1.000000e+01 : f32
    %cst_15 = arith.constant 1.000000e+01 : f32
    %24 = vector.broadcast %cst_14 : f32 to vector<1x1024xf32>
    %25 = arith.maximumf %24, %23 : vector<1x1024xf32>
    %26 = vector.broadcast %cst_15 : f32 to vector<1x1024xf32>
    %27 = arith.minimumf %26, %25 : vector<1x1024xf32>
    %c0_i32 = arith.constant 0 : i32
    %28 = arith.addi %0, %c0_i32 : i32
    %29 = tpu.iota {dimensions = array<i32: 1>} : vector<1x1024xi32>
    %30 = vector.broadcast %28 : i32 to vector<1x1024xi32>
    %31 = arith.addi %30, %29 : vector<1x1024xi32>
    %c5_i32 = arith.constant 5 : i32
    %32 = vector.broadcast %c5_i32 : i32 to vector<1x1024xi32>
    %33 = arith.cmpi slt, %31, %32 : vector<1x1024xi32>
    %cst_16 = arith.constant 0.000000e+00 : f32
    %34 = vector.broadcast %cst_16 : f32 to vector<1x1024xf32>
    %35 = arith.subf %34, %27 : vector<1x1024xf32>
    %36 = arith.select %33, %27, %35 : vector<1x1024xi1>, vector<1x1024xf32>
    %cst_17 = arith.constant 0.000000e+00 : f32
    %37 = vector.broadcast %cst_17 : f32 to vector<1x1024xf32>
    %38 = arith.minimumf %36, %37 : vector<1x1024xf32>
    %39 = math.absf %36 : vector<1x1024xf32>
    %cst_18 = arith.constant 0.000000e+00 : f32
    %40 = vector.broadcast %cst_18 : f32 to vector<1x1024xf32>
    %41 = arith.subf %40, %39 : vector<1x1024xf32>
    %42 = math.exp %41 : vector<1x1024xf32>
    %43 = math.log1p %42 : vector<1x1024xf32>
    %44 = arith.subf %38, %43 : vector<1x1024xf32>
    %c10_i32 = arith.constant 10 : i32
    %45 = vector.broadcast %c10_i32 : i32 to vector<1x1024xi32>
    %46 = arith.cmpi slt, %31, %45 : vector<1x1024xi32>
    %cst_19 = arith.constant 0.000000e+00 : f32
    %47 = vector.broadcast %cst_19 : f32 to vector<1x1024xf32>
    %48 = arith.select %46, %44, %47 : vector<1x1024xi1>, vector<1x1024xf32>
    %49 = arith.addf %5, %48 : vector<1x1024xf32>
    %50 = vector.shape_cast %49 : vector<1x1024xf32> to vector<1x1x1024xf32>
    %cst_20 = arith.constant dense<0.000000e+00> : vector<1xf32>
    %51 = vector.multi_reduction <add>, %50, %cst_20 [1, 2] : vector<1x1x1024xf32> to vector<1xf32>
    %52 = vector.shape_cast %51 : vector<1xf32> to vector<1x1x1xf32>
    %53 = vector.extract %52[0, 0, 0] : f32 from vector<1x1x1xf32>
    %54 = vector.broadcast %53 : f32 to vector<1x8x128xf32>
    %c0_21 = arith.constant 0 : index
    %c0_22 = arith.constant 0 : index
    %c0_23 = arith.constant 0 : index
    %55 = vector.load %arg5[%c0_21, %c0_22, %c0_23] : memref<1x8x128xf32, #tpu.memory_space<vmem>>, vector<1x8x128xf32>
    tpu.vector_store %arg5[%c0_21, %c0_22, %c0_23], %54 {strides = array<i32>} : memref<1x8x128xf32, #tpu.memory_space<vmem>>, vector<1x8x128xf32>,
    return
  }
  func.func @transform_0(%arg0: i32) -> (i32, i32) {
    %c0_i32 = arith.constant 0 : i32
    %c0_i32_0 = arith.constant 0 : i32
    %c0_i32_1 = arith.constant 0 : i32
    return %c0_i32, %c0_i32_0 : i32, i32
  }
  func.func @transform_1(%arg0: i32) -> (i32, i32) {
    %c0_i32 = arith.constant 0 : i32
    %c0_i32_0 = arith.constant 0 : i32
    %c0_i32_1 = arith.constant 0 : i32
    return %c0_i32, %c0_i32_0 : i32, i32
  }
  func.func @transform_2(%arg0: i32) -> (i32, i32) {
    %c0_i32 = arith.constant 0 : i32
    %c0_i32_0 = arith.constant 0 : i32
    return %c0_i32, %arg0 : i32, i32
  }
  func.func @transform_3(%arg0: i32) -> (i32, i32) {
    %c0_i32 = arith.constant 0 : i32
    %c0_i32_0 = arith.constant 0 : i32
    return %c0_i32, %arg0 : i32, i32
  }
  func.func @transform_4(%arg0: i32) -> (i32, i32, i32) {
    %c0_i32 = arith.constant 0 : i32
    %c0_i32_0 = arith.constant 0 : i32
    %c0_i32_1 = arith.constant 0 : i32
    return %arg0, %c0_i32, %c0_i32_0 : i32, i32, i32
  }
}

</mosaic_0001>

<llo_original>
// kernel: skipgram_loss.1
$region0: #{skipgram_loss.1}
  #allocation0 [shape = 'u32[]', space=smem, size = 0x4, offset = 0x4, fixed_abs, tag = 'smem constant byte address 0x4 - core index']
  #allocation1 [shape = 'u32[144,128]{1,0:T(1,128)}', space=vmem, size = 0x12000, scoped, tag = 'internal scratch']
  %s0 = inlined_call_operand.vmem [shape: bf16[32,256], index: 0, kind: input, shape index: {}]
  %s1 = inlined_call_operand.hbm [shape: bf16[32,256], index: 1, kind: input, shape index: {}]
  %s2 = inlined_call_operand.vmem [shape: s32[1,2048], index: 2, kind: input, shape index: {}]
  %s3 = inlined_call_operand.vmem [shape: s32[1,2048], index: 3, kind: input, shape index: {}]
  %s4 = inlined_call_operand.vmem [shape: f32[2,8,128], index: 4, kind: output, shape index: {}]
  %s5 = sld [smem:[#allocation0]]
  $region53: #{skipgram_loss.1} parent=0
    _
  %s7 = ssub.s32 1, %s5
  %s8 = scalar_select 0, %s7, %s5
  $region1: #{skipgram_loss.1} parent=0
    #allocation2 [shape = 'u8[16384]{0}', space=vmem, size = 0x4000, scoped, tag = 'input window, operand 1, single buffered']
    #allocation3 [shape = 's32[2]{0}', space=sflag, size = 0x8, scoped, tag = 'scoped memory for skipgram_loss.1']
    %9 = vsyncpa [#allocation3], 0
    loop: start=0, step=1, limit=4
    $region2: #{skipgram_loss.1} parent=1 // loop_pre_header
      _
    $region3: #{skipgram_loss.1} parent=1 // loop_header
      %s11 = sphi 0, %s15
      %p12 = scmp.ge.s32.totalorder %s11, 4
      %s19 = sphi 0, %s19
      %s21 = sphi 0, %s19
      %s22 = sphi 0, %s21
      %s36 = sphi 0, %s22
      %s40 = sphi 0, %s40
      %s42 = sphi 0, %s40
      %s43 = sphi 0, %s42
      %s57 = sphi 0, %s43
      %s63 = sphi 0, %s65
      %s66 = sphi 0, %s63
      %s67 = sphi 0, %s66
      %s83 = sphi 0, %s67
      %s89 = sphi 0, %s91
      %s92 = sphi 0, %s89
      %s93 = sphi 0, %s92
      %s109 = sphi 0, %s93
      %s115 = sphi 0, %s117
      %s118 = sphi 0, %s115
      %s119 = sphi 0, %s118
      %s135 = sphi 0, %s119
    $region4: #{skipgram_loss.1} parent=1 // loop_header_branch
      %14 = sbr.rel (%p12) target = $region8
    $region5: #{skipgram_loss.1} parent=1 // loop_body
      %s16 = ssub.s32 %s11, 1
      %s17 = ssub.s32 %s11, 2
      %s18 = sadd.s32 %s11, 1
      %s20 = sadd.s32 %s19, 1
      %p23 = scmp.eq.s32.totalorder %s11, 1
      %p24 = scmp.ne.s32.totalorder %s19, %s21
      %p25 = scmp.eq.s32.totalorder %s11, 0
      %p26 = por %p24, %p25
      %p27 = scmp.ne.s32.totalorder %s19, %s21
      %p28 = scmp.eq.s32.totalorder %s16, 1
      %p29 = por %p27, %p28
      %p30 = scmp.ne.s32.totalorder %s21, %s22
      %p31 = scmp.eq.s32.totalorder %s16, 0
      %p32 = por %p30, %p31
      %p33 = scmp.ne.s32.totalorder %s21, %s22
      %p34 = scmp.eq.s32.totalorder %s17, 1
      %p35 = por %p33, %p34
      %p37 = scmp.ne.s32.totalorder %s22, %s36
      %p38 = scmp.eq.s32.totalorder %s17, 0
      %p39 = por %p37, %p38
      %s41 = sadd.s32 %s40, 1
      %p44 = scmp.eq.s32.totalorder %s11, 1
      %p45 = scmp.ne.s32.totalorder %s40, %s42
      %p46 = scmp.eq.s32.totalorder %s11, 0
      %p47 = por %p45, %p46
      %p48 = scmp.ne.s32.totalorder %s40, %s42
      %p49 = scmp.eq.s32.totalorder %s16, 1
      %p50 = por %p48, %p49
      %p51 = scmp.ne.s32.totalorder %s42, %s43
      %p52 = scmp.eq.s32.totalorder %s16, 0
      %p53 = por %p51, %p52
      %p54 = scmp.ne.s32.totalorder %s42, %s43
      %p55 = scmp.eq.s32.totalorder %s17, 1
      %p56 = por %p54, %p55
      %p58 = scmp.ne.s32.totalorder %s43, %s57
      %p59 = scmp.eq.s32.totalorder %s17, 0
      %p60 = por %p58, %p59
      %s61 = ssub.s32 %s11, %s18
      %p62 = scmp.eq.s32.totalorder %s61, 0
      %s64 = sadd.s32 %s63, 1
      %s65 = scalar_select %p62, %s63, %s64
      %p68 = pneg %p62
      %p69 = scmp.eq.s32.totalorder %s11, 1
      %p70 = por %p68, %p69
      %p71 = scmp.ne.s32.totalorder %s63, %s66
      %p72 = scmp.eq.s32.totalorder %s11, 0
      %p73 = por %p71, %p72
      %p74 = scmp.ne.s32.totalorder %s63, %s66
      %p75 = scmp.eq.s32.totalorder %s16, 1
      %p76 = por %p74, %p75
      %p77 = scmp.ne.s32.totalorder %s66, %s67
      %p78 = scmp.eq.s32.totalorder %s16, 0
      %p79 = por %p77, %p78
      %p80 = scmp.ne.s32.totalorder %s66, %s67
      %p81 = scmp.eq.s32.totalorder %s17, 1
      %p82 = por %p80, %p81
      %p84 = scmp.ne.s32.totalorder %s67, %s83
      %p85 = scmp.eq.s32.totalorder %s17, 0
      %p86 = por %p84, %p85
      %s87 = ssub.s32 %s11, %s18
      %p88 = scmp.eq.s32.totalorder %s87, 0
      %s90 = sadd.s32 %s89, 1
      %s91 = scalar_select %p88, %s89, %s90
      %p94 = pneg %p88
      %p95 = scmp.eq.s32.totalorder %s11, 1
      %p96 = por %p94, %p95
      %p97 = scmp.ne.s32.totalorder %s89, %s92
      %p98 = scmp.eq.s32.totalorder %s11, 0
      %p99 = por %p97, %p98
      %p100 = scmp.ne.s32.totalorder %s89, %s92
      %p101 = scmp.eq.s32.totalorder %s16, 1
      %p102 = por %p100, %p101
      %p103 = scmp.ne.s32.totalorder %s92, %s93
      %p104 = scmp.eq.s32.totalorder %s16, 0
      %p105 = por %p103, %p104
      %p106 = scmp.ne.s32.totalorder %s92, %s93
      %p107 = scmp.eq.s32.totalorder %s17, 1
      %p108 = por %p106, %p107
      %p110 = scmp.ne.s32.totalorder %s93, %s109
      %p111 = scmp.eq.s32.totalorder %s17, 0
      %p112 = por %p110, %p111
      %s113 = ssub.s32 %s11, %s18
      %p114 = scmp.eq.s32.totalorder %s113, 0
      %s116 = sadd.s32 %s115, 1
      %s117 = scalar_select %p114, %s115, %s116
      %p120 = pneg %p114
      %p121 = scmp.eq.s32.totalorder %s11, 1
      %p122 = por %p120, %p121
      %p123 = scmp.ne.s32.totalorder %s115, %s118
      %p124 = scmp.eq.s32.totalorder %s11, 0
      %p125 = por %p123, %p124
      %p126 = scmp.ne.s32.totalorder %s115, %s118
      %p127 = scmp.eq.s32.totalorder %s16, 1
      %p128 = por %p126, %p127
      %p129 = scmp.ne.s32.totalorder %s118, %s119
      %p130 = scmp.eq.s32.totalorder %s16, 0
      %p131 = por %p129, %p130
      %p132 = scmp.ne.s32.totalorder %s118, %s119
      %p133 = scmp.eq.s32.totalorder %s17, 1
      %p134 = por %p132, %p133
      %p136 = scmp.ne.s32.totalorder %s119, %s135
      %p137 = scmp.eq.s32.totalorder %s17, 0
      %p138 = por %p136, %p137
      %p139 = scmp.le.s32.totalorder 1, %s11
      %p140 = scmp.lt.s32.totalorder %s11, 3
      %p141 = pnand %p139, %p140
      %p142 = pneg %p141
      // Predicated region
      $region9: #{skipgram_loss.1} parent=5 // pred_check
        _
      $region10: #{skipgram_loss.1} parent=5 // pred_check_branch
        %144 = sbr.rel (%p141) target = $region12
      $region11: #{skipgram_loss.1} parent=5 // pred_region
        %s145 = ssub.s32 %s11, 1
        // Predicated region
        $region13: #{skipgram_loss.1} parent=11 // pred_check
          %p146 = pneg %p32
        $region14: #{skipgram_loss.1} parent=11 // pred_check_branch
          %148 = sbr.rel (%p146) target = $region16
        $region15: #{skipgram_loss.1} parent=11 // pred_region
          _
        $region16: #{skipgram_loss.1} parent=11 // pred_fallthru
          _
        // Predicated region
        $region17: #{skipgram_loss.1} parent=11 // pred_check
          %p149 = pneg %p53
        $region18: #{skipgram_loss.1} parent=11 // pred_check_branch
          %151 = sbr.rel (%p149) target = $region20
        $region19: #{skipgram_loss.1} parent=11 // pred_region
          %s153 = ssub.s32 512, 512
          %154 = vsyncadd [#allocation3], %s153
          %s155 = sshll.u32 [#allocation2], 4
          %s156 = int_to_ptr.vmem [resolvable:$true] %s155
          %161 = dma.hbm_to_vmem [thread:$0]  %s1, 512, %s156, [#allocation3], 128, 128, 8
        $region20: #{skipgram_loss.1} parent=11 // pred_fallthru
          _
      $region12: #{skipgram_loss.1} parent=5 // pred_fallthru
        _
      %p162 = scmp.lt.s32.totalorder %s11, 2
      // Predicated region
      $region21: #{skipgram_loss.1} parent=5 // pred_check
        %p163 = pneg %p162
      $region22: #{skipgram_loss.1} parent=5 // pred_check_branch
        %165 = sbr.rel (%p163) target = $region24
      $region23: #{skipgram_loss.1} parent=5 // pred_region
        // Predicated region
        $region25: #{skipgram_loss.1} parent=23 // pred_check
          %p166 = pneg %p73
        $region26: #{skipgram_loss.1} parent=23 // pred_check_branch
          %168 = sbr.rel (%p166) target = $region28
        $region27: #{skipgram_loss.1} parent=23 // pred_region
          %s169 = smul.u32 8, %s11
          %p170 = scmp.lt.s32.totalorder %s169, 15
          %s171 = scalar_select %p170, %s169, 15
          %s172 = scalar_lea.vmem %s2, %s171
          %s173 = smul.u32 8, %s11
        $region28: #{skipgram_loss.1} parent=23 // pred_fallthru
          _
        // Predicated region
        $region29: #{skipgram_loss.1} parent=23 // pred_check
          %p174 = pneg %p99
        $region30: #{skipgram_loss.1} parent=23 // pred_check_branch
          %176 = sbr.rel (%p174) target = $region32
        $region31: #{skipgram_loss.1} parent=23 // pred_region
          %s177 = smul.u32 8, %s11
          %p178 = scmp.lt.s32.totalorder %s177, 15
          %s179 = scalar_select %p178, %s177, 15
          %s180 = scalar_lea.vmem %s3, %s179
          %s181 = smul.u32 8, %s11
        $region32: #{skipgram_loss.1} parent=23 // pred_fallthru
          _
      $region24: #{skipgram_loss.1} parent=5 // pred_fallthru
        _
      %p182 = scmp.le.s32.totalorder 1, %s11
      %p183 = scmp.lt.s32.totalorder %s11, 3
      %p184 = pnand %p182, %p183
      %p185 = pneg %p184
      // Predicated region
      $region33: #{skipgram_loss.1} parent=5 // pred_check
        _
      $region34: #{skipgram_loss.1} parent=5 // pred_check_branch
        %187 = sbr.rel (%p184) target = $region36
      $region35: #{skipgram_loss.1} parent=5 // pred_region
        %s188 = ssub.s32 %s11, 1
        // Predicated region
        $region37: #{skipgram_loss.1} parent=35 // pred_check
          %p189 = pneg %p53
        $region38: #{skipgram_loss.1} parent=35 // pred_check_branch
          %191 = sbr.rel (%p189) target = $region40
        $region39: #{skipgram_loss.1} parent=35 // pred_region
          %192 = dma.done [#allocation3], 512
        $region40: #{skipgram_loss.1} parent=35 // pred_fallthru
          _
        %p193 = pneg %p32
        %p194 = pneg %p29
        %p195 = pneg %p53
        %p196 = pneg %p50
        %s197 = smul.u32 8, %s16
        %p198 = scmp.lt.s32.totalorder %s197, 15
        %s199 = scalar_select %p198, %s197, 15
        %s200 = scalar_lea.vmem %s2, %s199
        %p201 = pneg %p79
        %p202 = pneg %p76
        %s203 = smul.u32 8, %s16
        %p204 = scmp.lt.s32.totalorder %s203, 15
        %s205 = scalar_select %p204, %s203, 15
        %s206 = scalar_lea.vmem %s3, %s205
        %p207 = pneg %p105
        %p208 = pneg %p102
        %p209 = pneg %p131
        %p210 = pneg %p128
        %p211 = scmp.lt.s32.totalorder %s16, 1
        %s212 = scalar_select %p211, %s16, 1
        %s213 = smul.addr %s212, 8
        %s214 = scalar_lea.vmem %s4, %s213
        %s215 = smul.u32 8, %s16
        %p216 = scmp.lt.s32.totalorder %s215, 15
        %s217 = scalar_select %p216, %s215, 15
        %s218 = scalar_lea.vmem %s2, %s217
        %s219 = smul.u32 8, %s16
        %s220 = smul.u32 8, %s16
        %p221 = scmp.lt.s32.totalorder %s220, 15
        %s222 = scalar_select %p221, %s220, 15
        %s223 = scalar_lea.vmem %s3, %s222
        %s224 = smul.u32 8, %s16
        %p225 = scmp.lt.s32.totalorder %s16, 1
        %s226 = scalar_select %p225, %s16, 1
        %s227 = smul.addr %s226, 8
        %s228 = scalar_lea.vmem %s4, %s227
        %s229 = smul.u32 %s16, 1024
        %v230 = vld [vmem:[%s0] sm:$0xff]
        %v231 = vld [vmem:[%s0 + $0x8] sm:$0xff]
        %v232 = vld [vmem:[%s0 + $0x10] sm:$0xff]
        %v233 = vld [vmem:[%s0 + $0x18] sm:$0xff]
        %v234 = vunpack.c.l.bf16 %v230
        %v235 = vunpack.c.h.bf16 %v230
        %v236 = vunpack.c.l.bf16 %v231
        %v237 = vunpack.c.h.bf16 %v231
        %v238 = vunpack.c.l.bf16 %v232
        %v239 = vunpack.c.h.bf16 %v232
        %v240 = vunpack.c.l.bf16 %v233
        %v241 = vunpack.c.h.bf16 %v233
        %v242 = vld [vmem:[#allocation2] sm:$0xff]
        %v243 = vld [vmem:[#allocation2 + $0x8] sm:$0xff]
        %v244 = vld [vmem:[#allocation2 + $0x10] sm:$0xff]
        %v245 = vld [vmem:[#allocation2 + $0x18] sm:$0xff]
        %v246 = vunpack.c.l.bf16 %v242
        %v247 = vunpack.c.h.bf16 %v242
        %v248 = vunpack.c.l.bf16 %v243
        %v249 = vunpack.c.h.bf16 %v243
        %v250 = vunpack.c.l.bf16 %v244
        %v251 = vunpack.c.h.bf16 %v244
        %v252 = vunpack.c.l.bf16 %v245
        %v253 = vunpack.c.h.bf16 %v245
        %v254 = vld [vmem:[%s218] sm:$0xff]
        %v255 = vld [vmem:[%s223] sm:$0xff]
        %v256 = vlaneseq
        %v257 = vshrl.u32 %v256, 7
        %v258 = vadd.s32 %v257, 8
        %v259 = vadd.s32 %v257, 16
        %v260 = vadd.s32 %v257, 24
        %v261 = vadd.s32 %v257, 32
        %v262 = vadd.s32 %v257, 40
        %v263 = vadd.s32 %v257, 48
        %v264 = vadd.s32 %v257, 56
        %v265 = vadd.s32 %v257, 64
        %v266 = vadd.s32 %v257, 72
        %v267 = vadd.s32 %v257, 80
        %v268 = vadd.s32 %v257, 88
        %v269 = vadd.s32 %v257, 96
        %v270 = vadd.s32 %v257, 104
        %v271 = vadd.s32 %v257, 112
        %v272 = vadd.s32 %v257, 120
        %v273 = vadd.s32 %v257, 128
        %v274 = vadd.s32 %v257, 136
        %v275 = vadd.s32 %v257, 144
        %v276 = vadd.s32 %v257, 152
        %v277 = vadd.s32 %v257, 160
        %v278 = vadd.s32 %v257, 168
        %v279 = vadd.s32 %v257, 176
        %v280 = vadd.s32 %v257, 184
        %v281 = vadd.s32 %v257, 192
        %v282 = vadd.s32 %v257, 200
        %v283 = vadd.s32 %v257, 208
        %v284 = vadd.s32 %v257, 216
        %v285 = vadd.s32 %v257, 224
        %v286 = vadd.s32 %v257, 232
        %v287 = vadd.s32 %v257, 240
        %v288 = vadd.s32 %v257, 248
        %v289 = vlaneseq
        %v290 = vshrl.u32 %v289, 7
        %v291 = vsub.s32 0, %v290
        %v292 = vrot.slane %v254, %v291
        %v293 = vlaneseq
        %v294 = vshrl.u32 %v293, 7
        %v295 = vsub.s32 1, %v294
        %v296 = vrot.slane %v254, %v295
        %v297 = vlaneseq
        %v298 = vshrl.u32 %v297, 7
        %v299 = vsub.s32 2, %v298
        %v300 = vrot.slane %v254, %v299
        %v301 = vlaneseq
        %v302 = vshrl.u32 %v301, 7
        %v303 = vsub.s32 3, %v302
        %v304 = vrot.slane %v254, %v303
        %v305 = vlaneseq
        %v306 = vshrl.u32 %v305, 7
        %v307 = vsub.s32 4, %v306
        %v308 = vrot.slane %v254, %v307
        %v309 = vlaneseq
        %v310 = vshrl.u32 %v309, 7
        %v311 = vsub.s32 5, %v310
        %v312 = vrot.slane %v254, %v311
        %v313 = vlaneseq
        %v314 = vshrl.u32 %v313, 7
        %v315 = vsub.s32 6, %v314
        %v316 = vrot.slane %v254, %v315
        %v317 = vlaneseq
        %v318 = vshrl.u32 %v317, 7
        %v319 = vsub.s32 7, %v318
        %v320 = vrot.slane %v254, %v319
        %vm321 = vcmp.eq.s32.totalorder %v257, %v292
        %vm322 = vcmp.eq.s32.totalorder %v257, %v296
        %vm323 = vcmp.eq.s32.totalorder %v257, %v300
        %vm324 = vcmp.eq.s32.totalorder %v257, %v304
        %vm325 = vcmp.eq.s32.totalorder %v257, %v308
        %vm326 = vcmp.eq.s32.totalorder %v257, %v312
        %vm327 = vcmp.eq.s32.totalorder %v257, %v316
        %vm328 = vcmp.eq.s32.totalorder %v257, %v320
        %vm329 = vcmp.eq.s32.totalorder %v258, %v292
        %vm330 = vcmp.eq.s32.totalorder %v258, %v296
        %vm331 = vcmp.eq.s32.totalorder %v258, %v300
        %vm332 = vcmp.eq.s32.totalorder %v258, %v304
        %vm333 = vcmp.eq.s32.totalorder %v258, %v308
        %vm334 = vcmp.eq.s32.totalorder %v258, %v312
        %vm335 = vcmp.eq.s32.totalorder %v258, %v316
        %vm336 = vcmp.eq.s32.totalorder %v258, %v320
        %vm337 = vcmp.eq.s32.totalorder %v259, %v292
        %vm338 = vcmp.eq.s32.totalorder %v259, %v296
        %vm339 = vcmp.eq.s32.totalorder %v259, %v300
        %vm340 = vcmp.eq.s32.totalorder %v259, %v304
        %vm341 = vcmp.eq.s32.totalorder %v259, %v308
        %vm342 = vcmp.eq.s32.totalorder %v259, %v312
        %vm343 = vcmp.eq.s32.totalorder %v259, %v316
        %vm344 = vcmp.eq.s32.totalorder %v259, %v320
        %vm345 = vcmp.eq.s32.totalorder %v260, %v292
        %vm346 = vcmp.eq.s32.totalorder %v260, %v296
        %vm347 = vcmp.eq.s32.totalorder %v260, %v300
        %vm348 = vcmp.eq.s32.totalorder %v260, %v304
        %vm349 = vcmp.eq.s32.totalorder %v260, %v308
        %vm350 = vcmp.eq.s32.totalorder %v260, %v312
        %vm351 = vcmp.eq.s32.totalorder %v260, %v316
        %vm352 = vcmp.eq.s32.totalorder %v260, %v320
        %vm353 = vcmp.eq.s32.totalorder %v261, %v292
        %vm354 = vcmp.eq.s32.totalorder %v261, %v296
        %vm355 = vcmp.eq.s32.totalorder %v261, %v300
        %vm356 = vcmp.eq.s32.totalorder %v261, %v304
        %vm357 = vcmp.eq.s32.totalorder %v261, %v308
        %vm358 = vcmp.eq.s32.totalorder %v261, %v312
        %vm359 = vcmp.eq.s32.totalorder %v261, %v316
        %vm360 = vcmp.eq.s32.totalorder %v261, %v320
        %vm361 = vcmp.eq.s32.totalorder %v262, %v292
        %vm362 = vcmp.eq.s32.totalorder %v262, %v296
        %vm363 = vcmp.eq.s32.totalorder %v262, %v300
        %vm364 = vcmp.eq.s32.totalorder %v262, %v304
        %vm365 = vcmp.eq.s32.totalorder %v262, %v308
        %vm366 = vcmp.eq.s32.totalorder %v262, %v312
        %vm367 = vcmp.eq.s32.totalorder %v262, %v316
        %vm368 = vcmp.eq.s32.totalorder %v262, %v320
        %vm369 = vcmp.eq.s32.totalorder %v263, %v292
        %vm370 = vcmp.eq.s32.totalorder %v263, %v296
        %vm371 = vcmp.eq.s32.totalorder %v263, %v300
        %vm372 = vcmp.eq.s32.totalorder %v263, %v304
        %vm373 = vcmp.eq.s32.totalorder %v263, %v308
        %vm374 = vcmp.eq.s32.totalorder %v263, %v312
        %vm375 = vcmp.eq.s32.totalorder %v263, %v316
        %vm376 = vcmp.eq.s32.totalorder %v263, %v320
        %vm377 = vcmp.eq.s32.totalorder %v264, %v292
        %vm378 = vcmp.eq.s32.totalorder %v264, %v296
        %vm379 = vcmp.eq.s32.totalorder %v264, %v300
        %vm380 = vcmp.eq.s32.totalorder %v264, %v304
        %vm381 = vcmp.eq.s32.totalorder %v264, %v308
        %vm382 = vcmp.eq.s32.totalorder %v264, %v312
        %vm383 = vcmp.eq.s32.totalorder %v264, %v316
        %vm384 = vcmp.eq.s32.totalorder %v264, %v320
        %vm385 = vcmp.eq.s32.totalorder %v265, %v292
        %vm386 = vcmp.eq.s32.totalorder %v265, %v296
        %vm387 = vcmp.eq.s32.totalorder %v265, %v300
        %vm388 = vcmp.eq.s32.totalorder %v265, %v304
        %vm389 = vcmp.eq.s32.totalorder %v265, %v308
        %vm390 = vcmp.eq.s32.totalorder %v265, %v312
        %vm391 = vcmp.eq.s32.totalorder %v265, %v316
        %vm392 = vcmp.eq.s32.totalorder %v265, %v320
        %vm393 = vcmp.eq.s32.totalorder %v266, %v292
        %vm394 = vcmp.eq.s32.totalorder %v266, %v296
        %vm395 = vcmp.eq.s32.totalorder %v266, %v300
        %vm396 = vcmp.eq.s32.totalorder %v266, %v304
        %vm397 = vcmp.eq.s32.totalorder %v266, %v308
        %vm398 = vcmp.eq.s32.totalorder %v266, %v312
        %vm399 = vcmp.eq.s32.totalorder %v266, %v316
        %vm400 = vcmp.eq.s32.totalorder %v266, %v320
        %vm401 = vcmp.eq.s32.totalorder %v267, %v292
        %vm402 = vcmp.eq.s32.totalorder %v267, %v296
        %vm403 = vcmp.eq.s32.totalorder %v267, %v300
        %vm404 = vcmp.eq.s32.totalorder %v267, %v304
        %vm405 = vcmp.eq.s32.totalorder %v267, %v308
        %vm406 = vcmp.eq.s32.totalorder %v267, %v312
        %vm407 = vcmp.eq.s32.totalorder %v267, %v316
        %vm408 = vcmp.eq.s32.totalorder %v267, %v320
        %vm409 = vcmp.eq.s32.totalorder %v268, %v292
        %vm410 = vcmp.eq.s32.totalorder %v268, %v296
        %vm411 = vcmp.eq.s32.totalorder %v268, %v300
        %vm412 = vcmp.eq.s32.totalorder %v268, %v304
        %vm413 = vcmp.eq.s32.totalorder %v268, %v308
        %vm414 = vcmp.eq.s32.totalorder %v268, %v312
        %vm415 = vcmp.eq.s32.totalorder %v268, %v316
        %vm416 = vcmp.eq.s32.totalorder %v268, %v320
        %vm417 = vcmp.eq.s32.totalorder %v269, %v292
        %vm418 = vcmp.eq.s32.totalorder %v269, %v296
        %vm419 = vcmp.eq.s32.totalorder %v269, %v300
        %vm420 = vcmp.eq.s32.totalorder %v269, %v304
        %vm421 = vcmp.eq.s32.totalorder %v269, %v308
        %vm422 = vcmp.eq.s32.totalorder %v269, %v312
        %vm423 = vcmp.eq.s32.totalorder %v269, %v316
        %vm424 = vcmp.eq.s32.totalorder %v269, %v320
        %vm425 = vcmp.eq.s32.totalorder %v270, %v292
        %vm426 = vcmp.eq.s32.totalorder %v270, %v296
        %vm427 = vcmp.eq.s32.totalorder %v270, %v300
        %vm428 = vcmp.eq.s32.totalorder %v270, %v304
        %vm429 = vcmp.eq.s32.totalorder %v270, %v308
        %vm430 = vcmp.eq.s32.totalorder %v270, %v312
        %vm431 = vcmp.eq.s32.totalorder %v270, %v316
        %vm432 = vcmp.eq.s32.totalorder %v270, %v320
        %vm433 = vcmp.eq.s32.totalorder %v271, %v292
        %vm434 = vcmp.eq.s32.totalorder %v271, %v296
        %vm435 = vcmp.eq.s32.totalorder %v271, %v300
        %vm436 = vcmp.eq.s32.totalorder %v271, %v304
        %vm437 = vcmp.eq.s32.totalorder %v271, %v308
        %vm438 = vcmp.eq.s32.totalorder %v271, %v312
        %vm439 = vcmp.eq.s32.totalorder %v271, %v316
        %vm440 = vcmp.eq.s32.totalorder %v271, %v320
        %vm441 = vcmp.eq.s32.totalorder %v272, %v292
        %vm442 = vcmp.eq.s32.totalorder %v272, %v296
        %vm443 = vcmp.eq.s32.totalorder %v272, %v300
        %vm444 = vcmp.eq.s32.totalorder %v272, %v304
        %vm445 = vcmp.eq.s32.totalorder %v272, %v308
        %vm446 = vcmp.eq.s32.totalorder %v272, %v312
        %vm447 = vcmp.eq.s32.totalorder %v272, %v316
        %vm448 = vcmp.eq.s32.totalorder %v272, %v320
        %vm449 = vcmp.eq.s32.totalorder %v273, %v292
        %vm450 = vcmp.eq.s32.totalorder %v273, %v296
        %vm451 = vcmp.eq.s32.totalorder %v273, %v300
        %vm452 = vcmp.eq.s32.totalorder %v273, %v304
        %vm453 = vcmp.eq.s32.totalorder %v273, %v308
        %vm454 = vcmp.eq.s32.totalorder %v273, %v312
        %vm455 = vcmp.eq.s32.totalorder %v273, %v316
        %vm456 = vcmp.eq.s32.totalorder %v273, %v320
        %vm457 = vcmp.eq.s32.totalorder %v274, %v292
        %vm458 = vcmp.eq.s32.totalorder %v274, %v296
        %vm459 = vcmp.eq.s32.totalorder %v274, %v300
        %vm460 = vcmp.eq.s32.totalorder %v274, %v304
        %vm461 = vcmp.eq.s32.totalorder %v274, %v308
        %vm462 = vcmp.eq.s32.totalorder %v274, %v312
        %vm463 = vcmp.eq.s32.totalorder %v274, %v316
        %vm464 = vcmp.eq.s32.totalorder %v274, %v320
        %vm465 = vcmp.eq.s32.totalorder %v275, %v292
        %vm466 = vcmp.eq.s32.totalorder %v275, %v296
        %vm467 = vcmp.eq.s32.totalorder %v275, %v300
        %vm468 = vcmp.eq.s32.totalorder %v275, %v304
        %vm469 = vcmp.eq.s32.totalorder %v275, %v308
        %vm470 = vcmp.eq.s32.totalorder %v275, %v312
        %vm471 = vcmp.eq.s32.totalorder %v275, %v316
        %vm472 = vcmp.eq.s32.totalorder %v275, %v320
        %vm473 = vcmp.eq.s32.totalorder %v276, %v292
        %vm474 = vcmp.eq.s32.totalorder %v276, %v296
        %vm475 = vcmp.eq.s32.totalorder %v276, %v300
        %vm476 = vcmp.eq.s32.totalorder %v276, %v304
        %vm477 = vcmp.eq.s32.totalorder %v276, %v308
        %vm478 = vcmp.eq.s32.totalorder %v276, %v312
        %vm479 = vcmp.eq.s32.totalorder %v276, %v316
        %vm480 = vcmp.eq.s32.totalorder %v276, %v320
        %vm481 = vcmp.eq.s32.totalorder %v277, %v292
        %vm482 = vcmp.eq.s32.totalorder %v277, %v296
        %vm483 = vcmp.eq.s32.totalorder %v277, %v300
        %vm484 = vcmp.eq.s32.totalorder %v277, %v304
        %vm485 = vcmp.eq.s32.totalorder %v277, %v308
        %vm486 = vcmp.eq.s32.totalorder %v277, %v312
        %vm487 = vcmp.eq.s32.totalorder %v277, %v316
        %vm488 = vcmp.eq.s32.totalorder %v277, %v320
        %vm489 = vcmp.eq.s32.totalorder %v278, %v292
        %vm490 = vcmp.eq.s32.totalorder %v278, %v296
        %vm491 = vcmp.eq.s32.totalorder %v278, %v300
        %vm492 = vcmp.eq.s32.totalorder %v278, %v304
        %vm493 = vcmp.eq.s32.totalorder %v278, %v308
        %vm494 = vcmp.eq.s32.totalorder %v278, %v312
        %vm495 = vcmp.eq.s32.totalorder %v278, %v316
        %vm496 = vcmp.eq.s32.totalorder %v278, %v320
        %vm497 = vcmp.eq.s32.totalorder %v279, %v292
        %vm498 = vcmp.eq.s32.totalorder %v279, %v296
        %vm499 = vcmp.eq.s32.totalorder %v279, %v300
        %vm500 = vcmp.eq.s32.totalorder %v279, %v304
        %vm501 = vcmp.eq.s32.totalorder %v279, %v308
        %vm502 = vcmp.eq.s32.totalorder %v279, %v312
        %vm503 = vcmp.eq.s32.totalorder %v279, %v316
        %vm504 = vcmp.eq.s32.totalorder %v279, %v320
        %vm505 = vcmp.eq.s32.totalorder %v280, %v292
        %vm506 = vcmp.eq.s32.totalorder %v280, %v296
        %vm507 = vcmp.eq.s32.totalorder %v280, %v300
        %vm508 = vcmp.eq.s32.totalorder %v280, %v304
        %vm509 = vcmp.eq.s32.totalorder %v280, %v308
        %vm510 = vcmp.eq.s32.totalorder %v280, %v312
        %vm511 = vcmp.eq.s32.totalorder %v280, %v316
        %vm512 = vcmp.eq.s32.totalorder %v280, %v320
        %vm513 = vcmp.eq.s32.totalorder %v281, %v292
        %vm514 = vcmp.eq.s32.totalorder %v281, %v296
        %vm515 = vcmp.eq.s32.totalorder %v281, %v300
        %vm516 = vcmp.eq.s32.totalorder %v281, %v304
        %vm517 = vcmp.eq.s32.totalorder %v281, %v308
        %vm518 = vcmp.eq.s32.totalorder %v281, %v312
        %vm519 = vcmp.eq.s32.totalorder %v281, %v316
        %vm520 = vcmp.eq.s32.totalorder %v281, %v320
        %vm521 = vcmp.eq.s32.totalorder %v282, %v292
        %vm522 = vcmp.eq.s32.totalorder %v282, %v296
        %vm523 = vcmp.eq.s32.totalorder %v282, %v300
        %vm524 = vcmp.eq.s32.totalorder %v282, %v304
        %vm525 = vcmp.eq.s32.totalorder %v282, %v308
        %vm526 = vcmp.eq.s32.totalorder %v282, %v312
        %vm527 = vcmp.eq.s32.totalorder %v282, %v316
        %vm528 = vcmp.eq.s32.totalorder %v282, %v320
        %vm529 = vcmp.eq.s32.totalorder %v283, %v292
        %vm530 = vcmp.eq.s32.totalorder %v283, %v296
        %vm531 = vcmp.eq.s32.totalorder %v283, %v300
        %vm532 = vcmp.eq.s32.totalorder %v283, %v304
        %vm533 = vcmp.eq.s32.totalorder %v283, %v308
        %vm534 = vcmp.eq.s32.totalorder %v283, %v312
        %vm535 = vcmp.eq.s32.totalorder %v283, %v316
        %vm536 = vcmp.eq.s32.totalorder %v283, %v320
        %vm537 = vcmp.eq.s32.totalorder %v284, %v292
        %vm538 = vcmp.eq.s32.totalorder %v284, %v296
        %vm539 = vcmp.eq.s32.totalorder %v284, %v300
        %vm540 = vcmp.eq.s32.totalorder %v284, %v304
        %vm541 = vcmp.eq.s32.totalorder %v284, %v308
        %vm542 = vcmp.eq.s32.totalorder %v284, %v312
        %vm543 = vcmp.eq.s32.totalorder %v284, %v316
        %vm544 = vcmp.eq.s32.totalorder %v284, %v320
        %vm545 = vcmp.eq.s32.totalorder %v285, %v292
        %vm546 = vcmp.eq.s32.totalorder %v285, %v296
        %vm547 = vcmp.eq.s32.totalorder %v285, %v300
        %vm548 = vcmp.eq.s32.totalorder %v285, %v304
        %vm549 = vcmp.eq.s32.totalorder %v285, %v308
        %vm550 = vcmp.eq.s32.totalorder %v285, %v312
        %vm551 = vcmp.eq.s32.totalorder %v285, %v316
        %vm552 = vcmp.eq.s32.totalorder %v285, %v320
        %vm553 = vcmp.eq.s32.totalorder %v286, %v292
        %vm554 = vcmp.eq.s32.totalorder %v286, %v296
        %vm555 = vcmp.eq.s32.totalorder %v286, %v300
        %vm556 = vcmp.eq.s32.totalorder %v286, %v304
        %vm557 = vcmp.eq.s32.totalorder %v286, %v308
        %vm558 = vcmp.eq.s32.totalorder %v286, %v312
        %vm559 = vcmp.eq.s32.totalorder %v286, %v316
        %vm560 = vcmp.eq.s32.totalorder %v286, %v320
        %vm561 = vcmp.eq.s32.totalorder %v287, %v292
        %vm562 = vcmp.eq.s32.totalorder %v287, %v296
        %vm563 = vcmp.eq.s32.totalorder %v287, %v300
        %vm564 = vcmp.eq.s32.totalorder %v287, %v304
        %vm565 = vcmp.eq.s32.totalorder %v287, %v308
        %vm566 = vcmp.eq.s32.totalorder %v287, %v312
        %vm567 = vcmp.eq.s32.totalorder %v287, %v316
        %vm568 = vcmp.eq.s32.totalorder %v287, %v320
        %vm569 = vcmp.eq.s32.totalorder %v288, %v292
        %vm570 = vcmp.eq.s32.totalorder %v288, %v296
        %vm571 = vcmp.eq.s32.totalorder %v288, %v300
        %vm572 = vcmp.eq.s32.totalorder %v288, %v304
        %vm573 = vcmp.eq.s32.totalorder %v288, %v308
        %vm574 = vcmp.eq.s32.totalorder %v288, %v312
        %vm575 = vcmp.eq.s32.totalorder %v288, %v316
        %vm576 = vcmp.eq.s32.totalorder %v288, %v320
        %v577 = vsel %vm321, 1.0, 0.0
        %v578 = vsel %vm322, 1.0, 0.0
        %v579 = vsel %vm323, 1.0, 0.0
        %v580 = vsel %vm324, 1.0, 0.0
        %v581 = vsel %vm325, 1.0, 0.0
        %v582 = vsel %vm326, 1.0, 0.0
        %v583 = vsel %vm327, 1.0, 0.0
        %v584 = vsel %vm328, 1.0, 0.0
        %v585 = vsel %vm329, 1.0, 0.0
        %v586 = vsel %vm330, 1.0, 0.0
        %v587 = vsel %vm331, 1.0, 0.0
        %v588 = vsel %vm332, 1.0, 0.0
        %v589 = vsel %vm333, 1.0, 0.0
        %v590 = vsel %vm334, 1.0, 0.0
        %v591 = vsel %vm335, 1.0, 0.0
        %v592 = vsel %vm336, 1.0, 0.0
        %v593 = vsel %vm337, 1.0, 0.0
        %v594 = vsel %vm338, 1.0, 0.0
        %v595 = vsel %vm339, 1.0, 0.0
        %v596 = vsel %vm340, 1.0, 0.0
        %v597 = vsel %vm341, 1.0, 0.0
        %v598 = vsel %vm342, 1.0, 0.0
        %v599 = vsel %vm343, 1.0, 0.0
        %v600 = vsel %vm344, 1.0, 0.0
        %v601 = vsel %vm345, 1.0, 0.0
        %v602 = vsel %vm346, 1.0, 0.0
        %v603 = vsel %vm347, 1.0, 0.0
        %v604 = vsel %vm348, 1.0, 0.0
        %v605 = vsel %vm349, 1.0, 0.0
        %v606 = vsel %vm350, 1.0, 0.0
        %v607 = vsel %vm351, 1.0, 0.0
        %v608 = vsel %vm352, 1.0, 0.0
        %v609 = vsel %vm353, 1.0, 0.0
        %v610 = vsel %vm354, 1.0, 0.0
        %v611 = vsel %vm355, 1.0, 0.0
        %v612 = vsel %vm356, 1.0, 0.0
        %v613 = vsel %vm357, 1.0, 0.0
        %v614 = vsel %vm358, 1.0, 0.0
        %v615 = vsel %vm359, 1.0, 0.0
        %v616 = vsel %vm360, 1.0, 0.0
        %v617 = vsel %vm361, 1.0, 0.0
        %v618 = vsel %vm362, 1.0, 0.0
        %v619 = vsel %vm363, 1.0, 0.0
        %v620 = vsel %vm364, 1.0, 0.0
        %v621 = vsel %vm365, 1.0, 0.0
        %v622 = vsel %vm366, 1.0, 0.0
        %v623 = vsel %vm367, 1.0, 0.0
        %v624 = vsel %vm368, 1.0, 0.0
        %v625 = vsel %vm369, 1.0, 0.0
        %v626 = vsel %vm370, 1.0, 0.0
        %v627 = vsel %vm371, 1.0, 0.0
        %v628 = vsel %vm372, 1.0, 0.0
        %v629 = vsel %vm373, 1.0, 0.0
        %v630 = vsel %vm374, 1.0, 0.0
        %v631 = vsel %vm375, 1.0, 0.0
        %v632 = vsel %vm376, 1.0, 0.0
        %v633 = vsel %vm377, 1.0, 0.0
        %v634 = vsel %vm378, 1.0, 0.0
        %v635 = vsel %vm379, 1.0, 0.0
        %v636 = vsel %vm380, 1.0, 0.0
        %v637 = vsel %vm381, 1.0, 0.0
        %v638 = vsel %vm382, 1.0, 0.0
        %v639 = vsel %vm383, 1.0, 0.0
        %v640 = vsel %vm384, 1.0, 0.0
        %v641 = vsel %vm385, 1.0, 0.0
        %v642 = vsel %vm386, 1.0, 0.0
        %v643 = vsel %vm387, 1.0, 0.0
        %v644 = vsel %vm388, 1.0, 0.0
        %v645 = vsel %vm389, 1.0, 0.0
        %v646 = vsel %vm390, 1.0, 0.0
        %v647 = vsel %vm391, 1.0, 0.0
        %v648 = vsel %vm392, 1.0, 0.0
        %v649 = vsel %vm393, 1.0, 0.0
        %v650 = vsel %vm394, 1.0, 0.0
        %v651 = vsel %vm395, 1.0, 0.0
        %v652 = vsel %vm396, 1.0, 0.0
        %v653 = vsel %vm397, 1.0, 0.0
        %v654 = vsel %vm398, 1.0, 0.0
        %v655 = vsel %vm399, 1.0, 0.0
        %v656 = vsel %vm400, 1.0, 0.0
        %v657 = vsel %vm401, 1.0, 0.0
        %v658 = vsel %vm402, 1.0, 0.0
        %v659 = vsel %vm403, 1.0, 0.0
        %v660 = vsel %vm404, 1.0, 0.0
        %v661 = vsel %vm405, 1.0, 0.0
        %v662 = vsel %vm406, 1.0, 0.0
        %v663 = vsel %vm407, 1.0, 0.0
        %v664 = vsel %vm408, 1.0, 0.0
        %v665 = vsel %vm409, 1.0, 0.0
        %v666 = vsel %vm410, 1.0, 0.0
        %v667 = vsel %vm411, 1.0, 0.0
        %v668 = vsel %vm412, 1.0, 0.0
        %v669 = vsel %vm413, 1.0, 0.0
        %v670 = vsel %vm414, 1.0, 0.0
        %v671 = vsel %vm415, 1.0, 0.0
        %v672 = vsel %vm416, 1.0, 0.0
        %v673 = vsel %vm417, 1.0, 0.0
        %v674 = vsel %vm418, 1.0, 0.0
        %v675 = vsel %vm419, 1.0, 0.0
        %v676 = vsel %vm420, 1.0, 0.0
        %v677 = vsel %vm421, 1.0, 0.0
        %v678 = vsel %vm422, 1.0, 0.0
        %v679 = vsel %vm423, 1.0, 0.0
        %v680 = vsel %vm424, 1.0, 0.0
        %v681 = vsel %vm425, 1.0, 0.0
        %v682 = vsel %vm426, 1.0, 0.0
        %v683 = vsel %vm427, 1.0, 0.0
        %v684 = vsel %vm428, 1.0, 0.0
        %v685 = vsel %vm429, 1.0, 0.0
        %v686 = vsel %vm430, 1.0, 0.0
        %v687 = vsel %vm431, 1.0, 0.0
        %v688 = vsel %vm432, 1.0, 0.0
        %v689 = vsel %vm433, 1.0, 0.0
        %v690 = vsel %vm434, 1.0, 0.0
        %v691 = vsel %vm435, 1.0, 0.0
        %v692 = vsel %vm436, 1.0, 0.0
        %v693 = vsel %vm437, 1.0, 0.0
        %v694 = vsel %vm438, 1.0, 0.0
        %v695 = vsel %vm439, 1.0, 0.0
        %v696 = vsel %vm440, 1.0, 0.0
        %v697 = vsel %vm441, 1.0, 0.0
        %v698 = vsel %vm442, 1.0, 0.0
        %v699 = vsel %vm443, 1.0, 0.0
        %v700 = vsel %vm444, 1.0, 0.0
        %v701 = vsel %vm445, 1.0, 0.0
        %v702 = vsel %vm446, 1.0, 0.0
        %v703 = vsel %vm447, 1.0, 0.0
        %v704 = vsel %vm448, 1.0, 0.0
        %v705 = vsel %vm449, 1.0, 0.0
        %v706 = vsel %vm450, 1.0, 0.0
        %v707 = vsel %vm451, 1.0, 0.0
        %v708 = vsel %vm452, 1.0, 0.0
        %v709 = vsel %vm453, 1.0, 0.0
        %v710 = vsel %vm454, 1.0, 0.0
        %v711 = vsel %vm455, 1.0, 0.0
        %v712 = vsel %vm456, 1.0, 0.0
        %v713 = vsel %vm457, 1.0, 0.0
        %v714 = vsel %vm458, 1.0, 0.0
        %v715 = vsel %vm459, 1.0, 0.0
        %v716 = vsel %vm460, 1.0, 0.0
        %v717 = vsel %vm461, 1.0, 0.0
        %v718 = vsel %vm462, 1.0, 0.0
        %v719 = vsel %vm463, 1.0, 0.0
        %v720 = vsel %vm464, 1.0, 0.0
        %v721 = vsel %vm465, 1.0, 0.0
        %v722 = vsel %vm466, 1.0, 0.0
        %v723 = vsel %vm467, 1.0, 0.0
        %v724 = vsel %vm468, 1.0, 0.0
        %v725 = vsel %vm469, 1.0, 0.0
        %v726 = vsel %vm470, 1.0, 0.0
        %v727 = vsel %vm471, 1.0, 0.0
        %v728 = vsel %vm472, 1.0, 0.0
        %v729 = vsel %vm473, 1.0, 0.0
        %v730 = vsel %vm474, 1.0, 0.0
        %v731 = vsel %vm475, 1.0, 0.0
        %v732 = vsel %vm476, 1.0, 0.0
        %v733 = vsel %vm477, 1.0, 0.0
        %v734 = vsel %vm478, 1.0, 0.0
        %v735 = vsel %vm479, 1.0, 0.0
        %v736 = vsel %vm480, 1.0, 0.0
        %v737 = vsel %vm481, 1.0, 0.0
        %v738 = vsel %vm482, 1.0, 0.0
        %v739 = vsel %vm483, 1.0, 0.0
        %v740 = vsel %vm484, 1.0, 0.0
        %v741 = vsel %vm485, 1.0, 0.0
        %v742 = vsel %vm486, 1.0, 0.0
        %v743 = vsel %vm487, 1.0, 0.0
        %v744 = vsel %vm488, 1.0, 0.0
        %v745 = vsel %vm489, 1.0, 0.0
        %v746 = vsel %vm490, 1.0, 0.0
        %v747 = vsel %vm491, 1.0, 0.0
        %v748 = vsel %vm492, 1.0, 0.0
        %v749 = vsel %vm493, 1.0, 0.0
        %v750 = vsel %vm494, 1.0, 0.0
        %v751 = vsel %vm495, 1.0, 0.0
        %v752 = vsel %vm496, 1.0, 0.0
        %v753 = vsel %vm497, 1.0, 0.0
        %v754 = vsel %vm498, 1.0, 0.0
        %v755 = vsel %vm499, 1.0, 0.0
        %v756 = vsel %vm500, 1.0, 0.0
        %v757 = vsel %vm501, 1.0, 0.0
        %v758 = vsel %vm502, 1.0, 0.0
        %v759 = vsel %vm503, 1.0, 0.0
        %v760 = vsel %vm504, 1.0, 0.0
        %v761 = vsel %vm505, 1.0, 0.0
        %v762 = vsel %vm506, 1.0, 0.0
        %v763 = vsel %vm507, 1.0, 0.0
        %v764 = vsel %vm508, 1.0, 0.0
        %v765 = vsel %vm509, 1.0, 0.0
        %v766 = vsel %vm510, 1.0, 0.0
        %v767 = vsel %vm511, 1.0, 0.0
        %v768 = vsel %vm512, 1.0, 0.0
        %v769 = vsel %vm513, 1.0, 0.0
        %v770 = vsel %vm514, 1.0, 0.0
        %v771 = vsel %vm515, 1.0, 0.0
        %v772 = vsel %vm516, 1.0, 0.0
        %v773 = vsel %vm517, 1.0, 0.0
        %v774 = vsel %vm518, 1.0, 0.0
        %v775 = vsel %vm519, 1.0, 0.0
        %v776 = vsel %vm520, 1.0, 0.0
        %v777 = vsel %vm521, 1.0, 0.0
        %v778 = vsel %vm522, 1.0, 0.0
        %v779 = vsel %vm523, 1.0, 0.0
        %v780 = vsel %vm524, 1.0, 0.0
        %v781 = vsel %vm525, 1.0, 0.0
        %v782 = vsel %vm526, 1.0, 0.0
        %v783 = vsel %vm527, 1.0, 0.0
        %v784 = vsel %vm528, 1.0, 0.0
        %v785 = vsel %vm529, 1.0, 0.0
        %v786 = vsel %vm530, 1.0, 0.0
        %v787 = vsel %vm531, 1.0, 0.0
        %v788 = vsel %vm532, 1.0, 0.0
        %v789 = vsel %vm533, 1.0, 0.0
        %v790 = vsel %vm534, 1.0, 0.0
        %v791 = vsel %vm535, 1.0, 0.0
        %v792 = vsel %vm536, 1.0, 0.0
        %v793 = vsel %vm537, 1.0, 0.0
        %v794 = vsel %vm538, 1.0, 0.0
        %v795 = vsel %vm539, 1.0, 0.0
        %v796 = vsel %vm540, 1.0, 0.0
        %v797 = vsel %vm541, 1.0, 0.0
        %v798 = vsel %vm542, 1.0, 0.0
        %v799 = vsel %vm543, 1.0, 0.0
        %v800 = vsel %vm544, 1.0, 0.0
        %v801 = vsel %vm545, 1.0, 0.0
        %v802 = vsel %vm546, 1.0, 0.0
        %v803 = vsel %vm547, 1.0, 0.0
        %v804 = vsel %vm548, 1.0, 0.0
        %v805 = vsel %vm549, 1.0, 0.0
        %v806 = vsel %vm550, 1.0, 0.0
        %v807 = vsel %vm551, 1.0, 0.0
        %v808 = vsel %vm552, 1.0, 0.0
        %v809 = vsel %vm553, 1.0, 0.0
        %v810 = vsel %vm554, 1.0, 0.0
        %v811 = vsel %vm555, 1.0, 0.0
        %v812 = vsel %vm556, 1.0, 0.0
        %v813 = vsel %vm557, 1.0, 0.0
        %v814 = vsel %vm558, 1.0, 0.0
        %v815 = vsel %vm559, 1.0, 0.0
        %v816 = vsel %vm560, 1.0, 0.0
        %v817 = vsel %vm561, 1.0, 0.0
        %v818 = vsel %vm562, 1.0, 0.0
        %v819 = vsel %vm563, 1.0, 0.0
        %v820 = vsel %vm564, 1.0, 0.0
        %v821 = vsel %vm565, 1.0, 0.0
        %v822 = vsel %vm566, 1.0, 0.0
        %v823 = vsel %vm567, 1.0, 0.0
        %v824 = vsel %vm568, 1.0, 0.0
        %v825 = vsel %vm569, 1.0, 0.0
        %v826 = vsel %vm570, 1.0, 0.0
        %v827 = vsel %vm571, 1.0, 0.0
        %v828 = vsel %vm572, 1.0, 0.0
        %v829 = vsel %vm573, 1.0, 0.0
        %v830 = vsel %vm574, 1.0, 0.0
        %v831 = vsel %vm575, 1.0, 0.0
        %v832 = vsel %vm576, 1.0, 0.0
        %v833 = vlaneseq
        %v834 = vshrl.u32 %v833, 7
        %v835 = vsub.s32 0, %v834
        %v836 = vrot.slane %v255, %v835
        %v837 = vlaneseq
        %v838 = vshrl.u32 %v837, 7
        %v839 = vsub.s32 1, %v838
        %v840 = vrot.slane %v255, %v839
        %v841 = vlaneseq
        %v842 = vshrl.u32 %v841, 7
        %v843 = vsub.s32 2, %v842
        %v844 = vrot.slane %v255, %v843
        %v845 = vlaneseq
        %v846 = vshrl.u32 %v845, 7
        %v847 = vsub.s32 3, %v846
        %v848 = vrot.slane %v255, %v847
        %v849 = vlaneseq
        %v850 = vshrl.u32 %v849, 7
        %v851 = vsub.s32 4, %v850
        %v852 = vrot.slane %v255, %v851
        %v853 = vlaneseq
        %v854 = vshrl.u32 %v853, 7
        %v855 = vsub.s32 5, %v854
        %v856 = vrot.slane %v255, %v855
        %v857 = vlaneseq
        %v858 = vshrl.u32 %v857, 7
        %v859 = vsub.s32 6, %v858
        %v860 = vrot.slane %v255, %v859
        %v861 = vlaneseq
        %v862 = vshrl.u32 %v861, 7
        %v863 = vsub.s32 7, %v862
        %v864 = vrot.slane %v255, %v863
        %vm865 = vcmp.eq.s32.totalorder %v257, %v836
        %vm866 = vcmp.eq.s32.totalorder %v257, %v840
        %vm867 = vcmp.eq.s32.totalorder %v257, %v844
        %vm868 = vcmp.eq.s32.totalorder %v257, %v848
        %vm869 = vcmp.eq.s32.totalorder %v257, %v852
        %vm870 = vcmp.eq.s32.totalorder %v257, %v856
        %vm871 = vcmp.eq.s32.totalorder %v257, %v860
        %vm872 = vcmp.eq.s32.totalorder %v257, %v864
        %vm873 = vcmp.eq.s32.totalorder %v258, %v836
        %vm874 = vcmp.eq.s32.totalorder %v258, %v840
        %vm875 = vcmp.eq.s32.totalorder %v258, %v844
        %vm876 = vcmp.eq.s32.totalorder %v258, %v848
        %vm877 = vcmp.eq.s32.totalorder %v258, %v852
        %vm878 = vcmp.eq.s32.totalorder %v258, %v856
        %vm879 = vcmp.eq.s32.totalorder %v258, %v860
        %vm880 = vcmp.eq.s32.totalorder %v258, %v864
        %vm881 = vcmp.eq.s32.totalorder %v259, %v836
        %vm882 = vcmp.eq.s32.totalorder %v259, %v840
        %vm883 = vcmp.eq.s32.totalorder %v259, %v844
        %vm884 = vcmp.eq.s32.totalorder %v259, %v848
        %vm885 = vcmp.eq.s32.totalorder %v259, %v852
        %vm886 = vcmp.eq.s32.totalorder %v259, %v856
        %vm887 = vcmp.eq.s32.totalorder %v259, %v860
        %vm888 = vcmp.eq.s32.totalorder %v259, %v864
        %vm889 = vcmp.eq.s32.totalorder %v260, %v836
        %vm890 = vcmp.eq.s32.totalorder %v260, %v840
        %vm891 = vcmp.eq.s32.totalorder %v260, %v844
        %vm892 = vcmp.eq.s32.totalorder %v260, %v848
        %vm893 = vcmp.eq.s32.totalorder %v260, %v852
        %vm894 = vcmp.eq.s32.totalorder %v260, %v856
        %vm895 = vcmp.eq.s32.totalorder %v260, %v860
        %vm896 = vcmp.eq.s32.totalorder %v260, %v864
        %vm897 = vcmp.eq.s32.totalorder %v261, %v836
        %vm898 = vcmp.eq.s32.totalorder %v261, %v840
        %vm899 = vcmp.eq.s32.totalorder %v261, %v844
        %vm900 = vcmp.eq.s32.totalorder %v261, %v848
        %vm901 = vcmp.eq.s32.totalorder %v261, %v852
        %vm902 = vcmp.eq.s32.totalorder %v261, %v856
        %vm903 = vcmp.eq.s32.totalorder %v261, %v860
        %vm904 = vcmp.eq.s32.totalorder %v261, %v864
        %vm905 = vcmp.eq.s32.totalorder %v262, %v836
        %vm906 = vcmp.eq.s32.totalorder %v262, %v840
        %vm907 = vcmp.eq.s32.totalorder %v262, %v844
        %vm908 = vcmp.eq.s32.totalorder %v262, %v848
        %vm909 = vcmp.eq.s32.totalorder %v262, %v852
        %vm910 = vcmp.eq.s32.totalorder %v262, %v856
        %vm911 = vcmp.eq.s32.totalorder %v262, %v860
        %vm912 = vcmp.eq.s32.totalorder %v262, %v864
        %vm913 = vcmp.eq.s32.totalorder %v263, %v836
        %vm914 = vcmp.eq.s32.totalorder %v263, %v840
        %vm915 = vcmp.eq.s32.totalorder %v263, %v844
        %vm916 = vcmp.eq.s32.totalorder %v263, %v848
        %vm917 = vcmp.eq.s32.totalorder %v263, %v852
        %vm918 = vcmp.eq.s32.totalorder %v263, %v856
        %vm919 = vcmp.eq.s32.totalorder %v263, %v860
        %vm920 = vcmp.eq.s32.totalorder %v263, %v864
        %vm921 = vcmp.eq.s32.totalorder %v264, %v836
        %vm922 = vcmp.eq.s32.totalorder %v264, %v840
        %vm923 = vcmp.eq.s32.totalorder %v264, %v844
        %vm924 = vcmp.eq.s32.totalorder %v264, %v848
        %vm925 = vcmp.eq.s32.totalorder %v264, %v852
        %vm926 = vcmp.eq.s32.totalorder %v264, %v856
        %vm927 = vcmp.eq.s32.totalorder %v264, %v860
        %vm928 = vcmp.eq.s32.totalorder %v264, %v864
        %vm929 = vcmp.eq.s32.totalorder %v265, %v836
        %vm930 = vcmp.eq.s32.totalorder %v265, %v840
        %vm931 = vcmp.eq.s32.totalorder %v265, %v844
        %vm932 = vcmp.eq.s32.totalorder %v265, %v848
        %vm933 = vcmp.eq.s32.totalorder %v265, %v852
        %vm934 = vcmp.eq.s32.totalorder %v265, %v856
        %vm935 = vcmp.eq.s32.totalorder %v265, %v860
        %vm936 = vcmp.eq.s32.totalorder %v265, %v864
        %vm937 = vcmp.eq.s32.totalorder %v266, %v836
        %vm938 = vcmp.eq.s32.totalorder %v266, %v840
        %vm939 = vcmp.eq.s32.totalorder %v266, %v844
        %vm940 = vcmp.eq.s32.totalorder %v266, %v848
        %vm941 = vcmp.eq.s32.totalorder %v266, %v852
        %vm942 = vcmp.eq.s32.totalorder %v266, %v856
        %vm943 = vcmp.eq.s32.totalorder %v266, %v860
        %vm944 = vcmp.eq.s32.totalorder %v266, %v864
        %vm945 = vcmp.eq.s32.totalorder %v267, %v836
        %vm946 = vcmp.eq.s32.totalorder %v267, %v840
        %vm947 = vcmp.eq.s32.totalorder %v267, %v844
        %vm948 = vcmp.eq.s32.totalorder %v267, %v848
        %vm949 = vcmp.eq.s32.totalorder %v267, %v852
        %vm950 = vcmp.eq.s32.totalorder %v267, %v856
        %vm951 = vcmp.eq.s32.totalorder %v267, %v860
        %vm952 = vcmp.eq.s32.totalorder %v267, %v864
        %vm953 = vcmp.eq.s32.totalorder %v268, %v836
        %vm954 = vcmp.eq.s32.totalorder %v268, %v840
        %vm955 = vcmp.eq.s32.totalorder %v268, %v844
        %vm956 = vcmp.eq.s32.totalorder %v268, %v848
        %vm957 = vcmp.eq.s32.totalorder %v268, %v852
        %vm958 = vcmp.eq.s32.totalorder %v268, %v856
        %vm959 = vcmp.eq.s32.totalorder %v268, %v860
        %vm960 = vcmp.eq.s32.totalorder %v268, %v864
        %vm961 = vcmp.eq.s32.totalorder %v269, %v836
        %vm962 = vcmp.eq.s32.totalorder %v269, %v840
        %vm963 = vcmp.eq.s32.totalorder %v269, %v844
        %vm964 = vcmp.eq.s32.totalorder %v269, %v848
        %vm965 = vcmp.eq.s32.totalorder %v269, %v852
        %vm966 = vcmp.eq.s32.totalorder %v269, %v856
        %vm967 = vcmp.eq.s32.totalorder %v269, %v860
        %vm968 = vcmp.eq.s32.totalorder %v269, %v864
        %vm969 = vcmp.eq.s32.totalorder %v270, %v836
        %vm970 = vcmp.eq.s32.totalorder %v270, %v840
        %vm971 = vcmp.eq.s32.totalorder %v270, %v844
        %vm972 = vcmp.eq.s32.totalorder %v270, %v848
        %vm973 = vcmp.eq.s32.totalorder %v270, %v852
        %vm974 = vcmp.eq.s32.totalorder %v270, %v856
        %vm975 = vcmp.eq.s32.totalorder %v270, %v860
        %vm976 = vcmp.eq.s32.totalorder %v270, %v864
        %vm977 = vcmp.eq.s32.totalorder %v271, %v836
        %vm978 = vcmp.eq.s32.totalorder %v271, %v840
        %vm979 = vcmp.eq.s32.totalorder %v271, %v844
        %vm980 = vcmp.eq.s32.totalorder %v271, %v848
        %vm981 = vcmp.eq.s32.totalorder %v271, %v852
        %vm982 = vcmp.eq.s32.totalorder %v271, %v856
        %vm983 = vcmp.eq.s32.totalorder %v271, %v860
        %vm984 = vcmp.eq.s32.totalorder %v271, %v864
        %vm985 = vcmp.eq.s32.totalorder %v272, %v836
        %vm986 = vcmp.eq.s32.totalorder %v272, %v840
        %vm987 = vcmp.eq.s32.totalorder %v272, %v844
        %vm988 = vcmp.eq.s32.totalorder %v272, %v848
        %vm989 = vcmp.eq.s32.totalorder %v272, %v852
        %vm990 = vcmp.eq.s32.totalorder %v272, %v856
        %vm991 = vcmp.eq.s32.totalorder %v272, %v860
        %vm992 = vcmp.eq.s32.totalorder %v272, %v864
        %vm993 = vcmp.eq.s32.totalorder %v273, %v836
        %vm994 = vcmp.eq.s32.totalorder %v273, %v840
        %vm995 = vcmp.eq.s32.totalorder %v273, %v844
        %vm996 = vcmp.eq.s32.totalorder %v273, %v848
        %vm997 = vcmp.eq.s32.totalorder %v273, %v852
        %vm998 = vcmp.eq.s32.totalorder %v273, %v856
        %vm999 = vcmp.eq.s32.totalorder %v273, %v860
        %vm1000 = vcmp.eq.s32.totalorder %v273, %v864
        %vm1001 = vcmp.eq.s32.totalorder %v274, %v836
        %vm1002 = vcmp.eq.s32.totalorder %v274, %v840
        %vm1003 = vcmp.eq.s32.totalorder %v274, %v844
        %vm1004 = vcmp.eq.s32.totalorder %v274, %v848
        %vm1005 = vcmp.eq.s32.totalorder %v274, %v852
        %vm1006 = vcmp.eq.s32.totalorder %v274, %v856
        %vm1007 = vcmp.eq.s32.totalorder %v274, %v860
        %vm1008 = vcmp.eq.s32.totalorder %v274, %v864
        %vm1009 = vcmp.eq.s32.totalorder %v275, %v836
        %vm1010 = vcmp.eq.s32.totalorder %v275, %v840
        %vm1011 = vcmp.eq.s32.totalorder %v275, %v844
        %vm1012 = vcmp.eq.s32.totalorder %v275, %v848
        %vm1013 = vcmp.eq.s32.totalorder %v275, %v852
        %vm1014 = vcmp.eq.s32.totalorder %v275, %v856
        %vm1015 = vcmp.eq.s32.totalorder %v275, %v860
        %vm1016 = vcmp.eq.s32.totalorder %v275, %v864
        %vm1017 = vcmp.eq.s32.totalorder %v276, %v836
        %vm1018 = vcmp.eq.s32.totalorder %v276, %v840
        %vm1019 = vcmp.eq.s32.totalorder %v276, %v844
        %vm1020 = vcmp.eq.s32.totalorder %v276, %v848
        %vm1021 = vcmp.eq.s32.totalorder %v276, %v852
        %vm1022 = vcmp.eq.s32.totalorder %v276, %v856
        %vm1023 = vcmp.eq.s32.totalorder %v276, %v860
        %vm1024 = vcmp.eq.s32.totalorder %v276, %v864
        %vm1025 = vcmp.eq.s32.totalorder %v277, %v836
        %vm1026 = vcmp.eq.s32.totalorder %v277, %v840
        %vm1027 = vcmp.eq.s32.totalorder %v277, %v844
        %vm1028 = vcmp.eq.s32.totalorder %v277, %v848
        %vm1029 = vcmp.eq.s32.totalorder %v277, %v852
        %vm1030 = vcmp.eq.s32.totalorder %v277, %v856
        %vm1031 = vcmp.eq.s32.totalorder %v277, %v860
        %vm1032 = vcmp.eq.s32.totalorder %v277, %v864
        %vm1033 = vcmp.eq.s32.totalorder %v278, %v836
        %vm1034 = vcmp.eq.s32.totalorder %v278, %v840
        %vm1035 = vcmp.eq.s32.totalorder %v278, %v844
        %vm1036 = vcmp.eq.s32.totalorder %v278, %v848
        %vm1037 = vcmp.eq.s32.totalorder %v278, %v852
        %vm1038 = vcmp.eq.s32.totalorder %v278, %v856
        %vm1039 = vcmp.eq.s32.totalorder %v278, %v860
        %vm1040 = vcmp.eq.s32.totalorder %v278, %v864
        %vm1041 = vcmp.eq.s32.totalorder %v279, %v836
        %vm1042 = vcmp.eq.s32.totalorder %v279, %v840
        %vm1043 = vcmp.eq.s32.totalorder %v279, %v844
        %vm1044 = vcmp.eq.s32.totalorder %v279, %v848
        %vm1045 = vcmp.eq.s32.totalorder %v279, %v852
        %vm1046 = vcmp.eq.s32.totalorder %v279, %v856
        %vm1047 = vcmp.eq.s32.totalorder %v279, %v860
        %vm1048 = vcmp.eq.s32.totalorder %v279, %v864
        %vm1049 = vcmp.eq.s32.totalorder %v280, %v836
        %vm1050 = vcmp.eq.s32.totalorder %v280, %v840
        %vm1051 = vcmp.eq.s32.totalorder %v280, %v844
        %vm1052 = vcmp.eq.s32.totalorder %v280, %v848
        %vm1053 = vcmp.eq.s32.totalorder %v280, %v852
        %vm1054 = vcmp.eq.s32.totalorder %v280, %v856
        %vm1055 = vcmp.eq.s32.totalorder %v280, %v860
        %vm1056 = vcmp.eq.s32.totalorder %v280, %v864
        %vm1057 = vcmp.eq.s32.totalorder %v281, %v836
        %vm1058 = vcmp.eq.s32.totalorder %v281, %v840
        %vm1059 = vcmp.eq.s32.totalorder %v281, %v844
        %vm1060 = vcmp.eq.s32.totalorder %v281, %v848
        %vm1061 = vcmp.eq.s32.totalorder %v281, %v852
        %vm1062 = vcmp.eq.s32.totalorder %v281, %v856
        %vm1063 = vcmp.eq.s32.totalorder %v281, %v860
        %vm1064 = vcmp.eq.s32.totalorder %v281, %v864
        %vm1065 = vcmp.eq.s32.totalorder %v282, %v836
        %vm1066 = vcmp.eq.s32.totalorder %v282, %v840
        %vm1067 = vcmp.eq.s32.totalorder %v282, %v844
        %vm1068 = vcmp.eq.s32.totalorder %v282, %v848
        %vm1069 = vcmp.eq.s32.totalorder %v282, %v852
        %vm1070 = vcmp.eq.s32.totalorder %v282, %v856
        %vm1071 = vcmp.eq.s32.totalorder %v282, %v860
        %vm1072 = vcmp.eq.s32.totalorder %v282, %v864
        %vm1073 = vcmp.eq.s32.totalorder %v283, %v836
        %vm1074 = vcmp.eq.s32.totalorder %v283, %v840
        %vm1075 = vcmp.eq.s32.totalorder %v283, %v844
        %vm1076 = vcmp.eq.s32.totalorder %v283, %v848
        %vm1077 = vcmp.eq.s32.totalorder %v283, %v852
        %vm1078 = vcmp.eq.s32.totalorder %v283, %v856
        %vm1079 = vcmp.eq.s32.totalorder %v283, %v860
        %vm1080 = vcmp.eq.s32.totalorder %v283, %v864
        %vm1081 = vcmp.eq.s32.totalorder %v284, %v836
        %vm1082 = vcmp.eq.s32.totalorder %v284, %v840
        %vm1083 = vcmp.eq.s32.totalorder %v284, %v844
        %vm1084 = vcmp.eq.s32.totalorder %v284, %v848
        %vm1085 = vcmp.eq.s32.totalorder %v284, %v852
        %vm1086 = vcmp.eq.s32.totalorder %v284, %v856
        %vm1087 = vcmp.eq.s32.totalorder %v284, %v860
        %vm1088 = vcmp.eq.s32.totalorder %v284, %v864
        %vm1089 = vcmp.eq.s32.totalorder %v285, %v836
        %vm1090 = vcmp.eq.s32.totalorder %v285, %v840
        %vm1091 = vcmp.eq.s32.totalorder %v285, %v844
        %vm1092 = vcmp.eq.s32.totalorder %v285, %v848
        %vm1093 = vcmp.eq.s32.totalorder %v285, %v852
        %vm1094 = vcmp.eq.s32.totalorder %v285, %v856
        %vm1095 = vcmp.eq.s32.totalorder %v285, %v860
        %vm1096 = vcmp.eq.s32.totalorder %v285, %v864
        %vm1097 = vcmp.eq.s32.totalorder %v286, %v836
        %vm1098 = vcmp.eq.s32.totalorder %v286, %v840
        %vm1099 = vcmp.eq.s32.totalorder %v286, %v844
        %vm1100 = vcmp.eq.s32.totalorder %v286, %v848
        %vm1101 = vcmp.eq.s32.totalorder %v286, %v852
        %vm1102 = vcmp.eq.s32.totalorder %v286, %v856
        %vm1103 = vcmp.eq.s32.totalorder %v286, %v860
        %vm1104 = vcmp.eq.s32.totalorder %v286, %v864
        %vm1105 = vcmp.eq.s32.totalorder %v287, %v836
        %vm1106 = vcmp.eq.s32.totalorder %v287, %v840
        %vm1107 = vcmp.eq.s32.totalorder %v287, %v844
        %vm1108 = vcmp.eq.s32.totalorder %v287, %v848
        %vm1109 = vcmp.eq.s32.totalorder %v287, %v852
        %vm1110 = vcmp.eq.s32.totalorder %v287, %v856
        %vm1111 = vcmp.eq.s32.totalorder %v287, %v860
        %vm1112 = vcmp.eq.s32.totalorder %v287, %v864
        %vm1113 = vcmp.eq.s32.totalorder %v288, %v836
        %vm1114 = vcmp.eq.s32.totalorder %v288, %v840
        %vm1115 = vcmp.eq.s32.totalorder %v288, %v844
        %vm1116 = vcmp.eq.s32.totalorder %v288, %v848
        %vm1117 = vcmp.eq.s32.totalorder %v288, %v852
        %vm1118 = vcmp.eq.s32.totalorder %v288, %v856
        %vm1119 = vcmp.eq.s32.totalorder %v288, %v860
        %vm1120 = vcmp.eq.s32.totalorder %v288, %v864
        %v1121 = vsel %vm865, 1.0, 0.0
        %v1122 = vsel %vm866, 1.0, 0.0
        %v1123 = vsel %vm867, 1.0, 0.0
        %v1124 = vsel %vm868, 1.0, 0.0
        %v1125 = vsel %vm869, 1.0, 0.0
        %v1126 = vsel %vm870, 1.0, 0.0
        %v1127 = vsel %vm871, 1.0, 0.0
        %v1128 = vsel %vm872, 1.0, 0.0
        %v1129 = vsel %vm873, 1.0, 0.0
        %v1130 = vsel %vm874, 1.0, 0.0
        %v1131 = vsel %vm875, 1.0, 0.0
        %v1132 = vsel %vm876, 1.0, 0.0
        %v1133 = vsel %vm877, 1.0, 0.0
        %v1134 = vsel %vm878, 1.0, 0.0
        %v1135 = vsel %vm879, 1.0, 0.0
        %v1136 = vsel %vm880, 1.0, 0.0
        %v1137 = vsel %vm881, 1.0, 0.0
        %v1138 = vsel %vm882, 1.0, 0.0
        %v1139 = vsel %vm883, 1.0, 0.0
        %v1140 = vsel %vm884, 1.0, 0.0
        %v1141 = vsel %vm885, 1.0, 0.0
        %v1142 = vsel %vm886, 1.0, 0.0
        %v1143 = vsel %vm887, 1.0, 0.0
        %v1144 = vsel %vm888, 1.0, 0.0
        %v1145 = vsel %vm889, 1.0, 0.0
        %v1146 = vsel %vm890, 1.0, 0.0
        %v1147 = vsel %vm891, 1.0, 0.0
        %v1148 = vsel %vm892, 1.0, 0.0
        %v1149 = vsel %vm893, 1.0, 0.0
        %v1150 = vsel %vm894, 1.0, 0.0
        %v1151 = vsel %vm895, 1.0, 0.0
        %v1152 = vsel %vm896, 1.0, 0.0
        %v1153 = vsel %vm897, 1.0, 0.0
        %v1154 = vsel %vm898, 1.0, 0.0
        %v1155 = vsel %vm899, 1.0, 0.0
        %v1156 = vsel %vm900, 1.0, 0.0
        %v1157 = vsel %vm901, 1.0, 0.0
        %v1158 = vsel %vm902, 1.0, 0.0
        %v1159 = vsel %vm903, 1.0, 0.0
        %v1160 = vsel %vm904, 1.0, 0.0
        %v1161 = vsel %vm905, 1.0, 0.0
        %v1162 = vsel %vm906, 1.0, 0.0
        %v1163 = vsel %vm907, 1.0, 0.0
        %v1164 = vsel %vm908, 1.0, 0.0
        %v1165 = vsel %vm909, 1.0, 0.0
        %v1166 = vsel %vm910, 1.0, 0.0
        %v1167 = vsel %vm911, 1.0, 0.0
        %v1168 = vsel %vm912, 1.0, 0.0
        %v1169 = vsel %vm913, 1.0, 0.0
        %v1170 = vsel %vm914, 1.0, 0.0
        %v1171 = vsel %vm915, 1.0, 0.0
        %v1172 = vsel %vm916, 1.0, 0.0
        %v1173 = vsel %vm917, 1.0, 0.0
        %v1174 = vsel %vm918, 1.0, 0.0
        %v1175 = vsel %vm919, 1.0, 0.0
        %v1176 = vsel %vm920, 1.0, 0.0
        %v1177 = vsel %vm921, 1.0, 0.0
        %v1178 = vsel %vm922, 1.0, 0.0
        %v1179 = vsel %vm923, 1.0, 0.0
        %v1180 = vsel %vm924, 1.0, 0.0
        %v1181 = vsel %vm925, 1.0, 0.0
        %v1182 = vsel %vm926, 1.0, 0.0
        %v1183 = vsel %vm927, 1.0, 0.0
        %v1184 = vsel %vm928, 1.0, 0.0
        %v1185 = vsel %vm929, 1.0, 0.0
        %v1186 = vsel %vm930, 1.0, 0.0
        %v1187 = vsel %vm931, 1.0, 0.0
        %v1188 = vsel %vm932, 1.0, 0.0
        %v1189 = vsel %vm933, 1.0, 0.0
        %v1190 = vsel %vm934, 1.0, 0.0
        %v1191 = vsel %vm935, 1.0, 0.0
        %v1192 = vsel %vm936, 1.0, 0.0
        %v1193 = vsel %vm937, 1.0, 0.0
        %v1194 = vsel %vm938, 1.0, 0.0
        %v1195 = vsel %vm939, 1.0, 0.0
        %v1196 = vsel %vm940, 1.0, 0.0
        %v1197 = vsel %vm941, 1.0, 0.0
        %v1198 = vsel %vm942, 1.0, 0.0
        %v1199 = vsel %vm943, 1.0, 0.0
        %v1200 = vsel %vm944, 1.0, 0.0
        %v1201 = vsel %vm945, 1.0, 0.0
        %v1202 = vsel %vm946, 1.0, 0.0
        %v1203 = vsel %vm947, 1.0, 0.0
        %v1204 = vsel %vm948, 1.0, 0.0
        %v1205 = vsel %vm949, 1.0, 0.0
        %v1206 = vsel %vm950, 1.0, 0.0
        %v1207 = vsel %vm951, 1.0, 0.0
        %v1208 = vsel %vm952, 1.0, 0.0
        %v1209 = vsel %vm953, 1.0, 0.0
        %v1210 = vsel %vm954, 1.0, 0.0
        %v1211 = vsel %vm955, 1.0, 0.0
        %v1212 = vsel %vm956, 1.0, 0.0
        %v1213 = vsel %vm957, 1.0, 0.0
        %v1214 = vsel %vm958, 1.0, 0.0
        %v1215 = vsel %vm959, 1.0, 0.0
        %v1216 = vsel %vm960, 1.0, 0.0
        %v1217 = vsel %vm961, 1.0, 0.0
        %v1218 = vsel %vm962, 1.0, 0.0
        %v1219 = vsel %vm963, 1.0, 0.0
        %v1220 = vsel %vm964, 1.0, 0.0
        %v1221 = vsel %vm965, 1.0, 0.0
        %v1222 = vsel %vm966, 1.0, 0.0
        %v1223 = vsel %vm967, 1.0, 0.0
        %v1224 = vsel %vm968, 1.0, 0.0
        %v1225 = vsel %vm969, 1.0, 0.0
        %v1226 = vsel %vm970, 1.0, 0.0
        %v1227 = vsel %vm971, 1.0, 0.0
        %v1228 = vsel %vm972, 1.0, 0.0
        %v1229 = vsel %vm973, 1.0, 0.0
        %v1230 = vsel %vm974, 1.0, 0.0
        %v1231 = vsel %vm975, 1.0, 0.0
        %v1232 = vsel %vm976, 1.0, 0.0
        %v1233 = vsel %vm977, 1.0, 0.0
        %v1234 = vsel %vm978, 1.0, 0.0
        %v1235 = vsel %vm979, 1.0, 0.0
        %v1236 = vsel %vm980, 1.0, 0.0
        %v1237 = vsel %vm981, 1.0, 0.0
        %v1238 = vsel %vm982, 1.0, 0.0
        %v1239 = vsel %vm983, 1.0, 0.0
        %v1240 = vsel %vm984, 1.0, 0.0
        %v1241 = vsel %vm985, 1.0, 0.0
        %v1242 = vsel %vm986, 1.0, 0.0
        %v1243 = vsel %vm987, 1.0, 0.0
        %v1244 = vsel %vm988, 1.0, 0.0
        %v1245 = vsel %vm989, 1.0, 0.0
        %v1246 = vsel %vm990, 1.0, 0.0
        %v1247 = vsel %vm991, 1.0, 0.0
        %v1248 = vsel %vm992, 1.0, 0.0
        %v1249 = vsel %vm993, 1.0, 0.0
        %v1250 = vsel %vm994, 1.0, 0.0
        %v1251 = vsel %vm995, 1.0, 0.0
        %v1252 = vsel %vm996, 1.0, 0.0
        %v1253 = vsel %vm997, 1.0, 0.0
        %v1254 = vsel %vm998, 1.0, 0.0
        %v1255 = vsel %vm999, 1.0, 0.0
        %v1256 = vsel %vm1000, 1.0, 0.0
        %v1257 = vsel %vm1001, 1.0, 0.0
        %v1258 = vsel %vm1002, 1.0, 0.0
        %v1259 = vsel %vm1003, 1.0, 0.0
        %v1260 = vsel %vm1004, 1.0, 0.0
        %v1261 = vsel %vm1005, 1.0, 0.0
        %v1262 = vsel %vm1006, 1.0, 0.0
        %v1263 = vsel %vm1007, 1.0, 0.0
        %v1264 = vsel %vm1008, 1.0, 0.0
        %v1265 = vsel %vm1009, 1.0, 0.0
        %v1266 = vsel %vm1010, 1.0, 0.0
        %v1267 = vsel %vm1011, 1.0, 0.0
        %v1268 = vsel %vm1012, 1.0, 0.0
        %v1269 = vsel %vm1013, 1.0, 0.0
        %v1270 = vsel %vm1014, 1.0, 0.0
        %v1271 = vsel %vm1015, 1.0, 0.0
        %v1272 = vsel %vm1016, 1.0, 0.0
        %v1273 = vsel %vm1017, 1.0, 0.0
        %v1274 = vsel %vm1018, 1.0, 0.0
        %v1275 = vsel %vm1019, 1.0, 0.0
        %v1276 = vsel %vm1020, 1.0, 0.0
        %v1277 = vsel %vm1021, 1.0, 0.0
        %v1278 = vsel %vm1022, 1.0, 0.0
        %v1279 = vsel %vm1023, 1.0, 0.0
        %v1280 = vsel %vm1024, 1.0, 0.0
        %v1281 = vsel %vm1025, 1.0, 0.0
        %v1282 = vsel %vm1026, 1.0, 0.0
        %v1283 = vsel %vm1027, 1.0, 0.0
        %v1284 = vsel %vm1028, 1.0, 0.0
        %v1285 = vsel %vm1029, 1.0, 0.0
        %v1286 = vsel %vm1030, 1.0, 0.0
        %v1287 = vsel %vm1031, 1.0, 0.0
        %v1288 = vsel %vm1032, 1.0, 0.0
        %v1289 = vsel %vm1033, 1.0, 0.0
        %v1290 = vsel %vm1034, 1.0, 0.0
        %v1291 = vsel %vm1035, 1.0, 0.0
        %v1292 = vsel %vm1036, 1.0, 0.0
        %v1293 = vsel %vm1037, 1.0, 0.0
        %v1294 = vsel %vm1038, 1.0, 0.0
        %v1295 = vsel %vm1039, 1.0, 0.0
        %v1296 = vsel %vm1040, 1.0, 0.0
        %v1297 = vsel %vm1041, 1.0, 0.0
        %v1298 = vsel %vm1042, 1.0, 0.0
        %v1299 = vsel %vm1043, 1.0, 0.0
        %v1300 = vsel %vm1044, 1.0, 0.0
        %v1301 = vsel %vm1045, 1.0, 0.0
        %v1302 = vsel %vm1046, 1.0, 0.0
        %v1303 = vsel %vm1047, 1.0, 0.0
        %v1304 = vsel %vm1048, 1.0, 0.0
        %v1305 = vsel %vm1049, 1.0, 0.0
        %v1306 = vsel %vm1050, 1.0, 0.0
        %v1307 = vsel %vm1051, 1.0, 0.0
        %v1308 = vsel %vm1052, 1.0, 0.0
        %v1309 = vsel %vm1053, 1.0, 0.0
        %v1310 = vsel %vm1054, 1.0, 0.0
        %v1311 = vsel %vm1055, 1.0, 0.0
        %v1312 = vsel %vm1056, 1.0, 0.0
        %v1313 = vsel %vm1057, 1.0, 0.0
        %v1314 = vsel %vm1058, 1.0, 0.0
        %v1315 = vsel %vm1059, 1.0, 0.0
        %v1316 = vsel %vm1060, 1.0, 0.0
        %v1317 = vsel %vm1061, 1.0, 0.0
        %v1318 = vsel %vm1062, 1.0, 0.0
        %v1319 = vsel %vm1063, 1.0, 0.0
        %v1320 = vsel %vm1064, 1.0, 0.0
        %v1321 = vsel %vm1065, 1.0, 0.0
        %v1322 = vsel %vm1066, 1.0, 0.0
        %v1323 = vsel %vm1067, 1.0, 0.0
        %v1324 = vsel %vm1068, 1.0, 0.0
        %v1325 = vsel %vm1069, 1.0, 0.0
        %v1326 = vsel %vm1070, 1.0, 0.0
        %v1327 = vsel %vm1071, 1.0, 0.0
        %v1328 = vsel %vm1072, 1.0, 0.0
        %v1329 = vsel %vm1073, 1.0, 0.0
        %v1330 = vsel %vm1074, 1.0, 0.0
        %v1331 = vsel %vm1075, 1.0, 0.0
        %v1332 = vsel %vm1076, 1.0, 0.0
        %v1333 = vsel %vm1077, 1.0, 0.0
        %v1334 = vsel %vm1078, 1.0, 0.0
        %v1335 = vsel %vm1079, 1.0, 0.0
        %v1336 = vsel %vm1080, 1.0, 0.0
        %v1337 = vsel %vm1081, 1.0, 0.0
        %v1338 = vsel %vm1082, 1.0, 0.0
        %v1339 = vsel %vm1083, 1.0, 0.0
        %v1340 = vsel %vm1084, 1.0, 0.0
        %v1341 = vsel %vm1085, 1.0, 0.0
        %v1342 = vsel %vm1086, 1.0, 0.0
        %v1343 = vsel %vm1087, 1.0, 0.0
        %v1344 = vsel %vm1088, 1.0, 0.0
        %v1345 = vsel %vm1089, 1.0, 0.0
        %v1346 = vsel %vm1090, 1.0, 0.0
        %v1347 = vsel %vm1091, 1.0, 0.0
        %v1348 = vsel %vm1092, 1.0, 0.0
        %v1349 = vsel %vm1093, 1.0, 0.0
        %v1350 = vsel %vm1094, 1.0, 0.0
        %v1351 = vsel %vm1095, 1.0, 0.0
        %v1352 = vsel %vm1096, 1.0, 0.0
        %v1353 = vsel %vm1097, 1.0, 0.0
        %v1354 = vsel %vm1098, 1.0, 0.0
        %v1355 = vsel %vm1099, 1.0, 0.0
        %v1356 = vsel %vm1100, 1.0, 0.0
        %v1357 = vsel %vm1101, 1.0, 0.0
        %v1358 = vsel %vm1102, 1.0, 0.0
        %v1359 = vsel %vm1103, 1.0, 0.0
        %v1360 = vsel %vm1104, 1.0, 0.0
        %v1361 = vsel %vm1105, 1.0, 0.0
        %v1362 = vsel %vm1106, 1.0, 0.0
        %v1363 = vsel %vm1107, 1.0, 0.0
        %v1364 = vsel %vm1108, 1.0, 0.0
        %v1365 = vsel %vm1109, 1.0, 0.0
        %v1366 = vsel %vm1110, 1.0, 0.0
        %v1367 = vsel %vm1111, 1.0, 0.0
        %v1368 = vsel %vm1112, 1.0, 0.0
        %v1369 = vsel %vm1113, 1.0, 0.0
        %v1370 = vsel %vm1114, 1.0, 0.0
        %v1371 = vsel %vm1115, 1.0, 0.0
        %v1372 = vsel %vm1116, 1.0, 0.0
        %v1373 = vsel %vm1117, 1.0, 0.0
        %v1374 = vsel %vm1118, 1.0, 0.0
        %v1375 = vsel %vm1119, 1.0, 0.0
        %v1376 = vsel %vm1120, 1.0, 0.0
        %1377 = vmatprep.subr.mxu0 %v578
        %1378 = vmatpush1.msra.mxu0 %v577
        %1379 = vmatprep.subr.mxu0 %v586
        %1380 = vmatpush1.msra.mxu0 %v585
        %1381 = vmatprep.subr.mxu0 %v594
        %1382 = vmatpush1.msra.mxu0 %v593
        %1383 = vmatprep.subr.mxu0 %v602
        %1384 = vmatpush1.msra.mxu0 %v601
        %1385 = vmatprep.subr.mxu0 %v610
        %1386 = vmatpush1.msra.mxu0 %v609
        %1387 = vmatprep.subr.mxu0 %v618
        %1388 = vmatpush1.msra.mxu0 %v617
        %1389 = vmatprep.subr.mxu0 %v626
        %1390 = vmatpush1.msra.mxu0 %v625
        %1391 = vmatprep.subr.mxu0 %v634
        %1392 = vmatpush1.msra.mxu0 %v633
        %1393 = vmatprep.subr.mxu0 %v642
        %1394 = vmatpush1.msra.mxu0 %v641
        %1395 = vmatprep.subr.mxu0 %v650
        %1396 = vmatpush1.msra.mxu0 %v649
        %1397 = vmatprep.subr.mxu0 %v658
        %1398 = vmatpush1.msra.mxu0 %v657
        %1399 = vmatprep.subr.mxu0 %v666
        %1400 = vmatpush1.msra.mxu0 %v665
        %1401 = vmatprep.subr.mxu0 %v674
        %1402 = vmatpush1.msra.mxu0 %v673
        %1403 = vmatprep.subr.mxu0 %v682
        %1404 = vmatpush1.msra.mxu0 %v681
        %1405 = vmatprep.subr.mxu0 %v690
        %1406 = vmatpush1.msra.mxu0 %v689
        %1407 = vmatprep.subr.mxu0 %v698
        %1408 = vmatpush1.msra.mxu0 %v697
        %1409 = vmatprep.subr.mxu0 %v706
        %1410 = vmatpush1.msra.mxu0 %v705
        %1411 = vmatprep.subr.mxu0 %v714
        %1412 = vmatpush1.msra.mxu0 %v713
        %1413 = vmatprep.subr.mxu0 %v722
        %1414 = vmatpush1.msra.mxu0 %v721
        %1415 = vmatprep.subr.mxu0 %v730
        %1416 = vmatpush1.msra.mxu0 %v729
        %1417 = vmatprep.subr.mxu0 %v738
        %1418 = vmatpush1.msra.mxu0 %v737
        %1419 = vmatprep.subr.mxu0 %v746
        %1420 = vmatpush1.msra.mxu0 %v745
        %1421 = vmatprep.subr.mxu0 %v754
        %1422 = vmatpush1.msra.mxu0 %v753
        %1423 = vmatprep.subr.mxu0 %v762
        %1424 = vmatpush1.msra.mxu0 %v761
        %1425 = vmatprep.subr.mxu0 %v770
        %1426 = vmatpush1.msra.mxu0 %v769
        %1427 = vmatprep.subr.mxu0 %v778
        %1428 = vmatpush1.msra.mxu0 %v777
        %1429 = vmatprep.subr.mxu0 %v786
        %1430 = vmatpush1.msra.mxu0 %v785
        %1431 = vmatprep.subr.mxu0 %v794
        %1432 = vmatpush1.msra.mxu0 %v793
        %1433 = vmatprep.subr.mxu0 %v802
        %1434 = vmatpush1.msra.mxu0 %v801
        %1435 = vmatprep.subr.mxu0 %v810
        %1436 = vmatpush1.msra.mxu0 %v809
        %1437 = vmatprep.subr.mxu0 %v818
        %1438 = vmatpush1.msra.mxu0 %v817
        %1439 = vmatprep.subr.mxu0 %v826
        %1440 = vmatpush1.msra.mxu0 %v825
        %1441 = vmatprep.mubr.f32.mxu0 %v235
        %1442 = vmatmul.mubr.f32.gmra.mrb[0].mxu0 %v234
        %v1443 = vpop.f32.mrb[0].mxu0
        %v1444 = vadd.f32 0.0, %v1443
        %v1445 = vpop.f32.mrb[0].mxu0
        %v1446 = vadd.f32 0.0, %v1445
        %1447 = vmatprep.mubr.f32.mxu0 %v237
        %1448 = vmatmul.mubr.f32.gmra.mrb[0].mxu0 %v236
        %v1449 = vpop.f32.mrb[0].mxu0
        %v1450 = vadd.f32 0.0, %v1449
        %v1451 = vpop.f32.mrb[0].mxu0
        %v1452 = vadd.f32 0.0, %v1451
        %1453 = vmatprep.mubr.f32.mxu0 %v239
        %1454 = vmatmul.mubr.f32.gmra.mrb[0].mxu0 %v238
        %v1455 = vpop.f32.mrb[0].mxu0
        %v1456 = vadd.f32 0.0, %v1455
        %v1457 = vpop.f32.mrb[0].mxu0
        %v1458 = vadd.f32 0.0, %v1457
        %1459 = vmatprep.mubr.f32.mxu0 %v241
        %1460 = vmatmul.mubr.f32.gmra.mrb[0].mxu0 %v240
        %v1461 = vpop.f32.mrb[0].mxu0
        %v1462 = vadd.f32 0.0, %v1461
        %v1463 = vpop.f32.mrb[0].mxu0
        %v1464 = vadd.f32 0.0, %v1463
        %1465 = vdwg.mxu0
        %1466 = vmatprep.subr.mxu0 %v580
        %1467 = vmatpush1.msra.mxu0 %v579
        %1468 = vmatprep.subr.mxu0 %v588
        %1469 = vmatpush1.msra.mxu0 %v587
        %1470 = vmatprep.subr.mxu0 %v596
        %1471 = vmatpush1.msra.mxu0 %v595
        %1472 = vmatprep.subr.mxu0 %v604
        %1473 = vmatpush1.msra.mxu0 %v603
        %1474 = vmatprep.subr.mxu0 %v612
        %1475 = vmatpush1.msra.mxu0 %v611
        %1476 = vmatprep.subr.mxu0 %v620
        %1477 = vmatpush1.msra.mxu0 %v619
        %1478 = vmatprep.subr.mxu0 %v628
        %1479 = vmatpush1.msra.mxu0 %v627
        %1480 = vmatprep.subr.mxu0 %v636
        %1481 = vmatpush1.msra.mxu0 %v635
        %1482 = vmatprep.subr.mxu0 %v644
        %1483 = vmatpush1.msra.mxu0 %v643
        %1484 = vmatprep.subr.mxu0 %v652
        %1485 = vmatpush1.msra.mxu0 %v651
        %1486 = vmatprep.subr.mxu0 %v660
        %1487 = vmatpush1.msra.mxu0 %v659
        %1488 = vmatprep.subr.mxu0 %v668
        %1489 = vmatpush1.msra.mxu0 %v667
        %1490 = vmatprep.subr.mxu0 %v676
        %1491 = vmatpush1.msra.mxu0 %v675
        %1492 = vmatprep.subr.mxu0 %v684
        %1493 = vmatpush1.msra.mxu0 %v683
        %1494 = vmatprep.subr.mxu0 %v692
        %1495 = vmatpush1.msra.mxu0 %v691
        %1496 = vmatprep.subr.mxu0 %v700
        %1497 = vmatpush1.msra.mxu0 %v699
        %1498 = vmatprep.subr.mxu0 %v708
        %1499 = vmatpush1.msra.mxu0 %v707
        %1500 = vmatprep.subr.mxu0 %v716
        %1501 = vmatpush1.msra.mxu0 %v715
        %1502 = vmatprep.subr.mxu0 %v724
        %1503 = vmatpush1.msra.mxu0 %v723
        %1504 = vmatprep.subr.mxu0 %v732
        %1505 = vmatpush1.msra.mxu0 %v731
        %1506 = vmatprep.subr.mxu0 %v740
        %1507 = vmatpush1.msra.mxu0 %v739
        %1508 = vmatprep.subr.mxu0 %v748
        %1509 = vmatpush1.msra.mxu0 %v747
        %1510 = vmatprep.subr.mxu0 %v756
        %1511 = vmatpush1.msra.mxu0 %v755
        %1512 = vmatprep.subr.mxu0 %v764
        %1513 = vmatpush1.msra.mxu0 %v763
        %1514 = vmatprep.subr.mxu0 %v772
        %1515 = vmatpush1.msra.mxu0 %v771
        %1516 = vmatprep.subr.mxu0 %v780
        %1517 = vmatpush1.msra.mxu0 %v779
        %1518 = vmatprep.subr.mxu0 %v788
        %1519 = vmatpush1.msra.mxu0 %v787
        %1520 = vmatprep.subr.mxu0 %v796
        %1521 = vmatpush1.msra.mxu0 %v795
        %1522 = vmatprep.subr.mxu0 %v804
        %1523 = vmatpush1.msra.mxu0 %v803
        %1524 = vmatprep.subr.mxu0 %v812
        %1525 = vmatpush1.msra.mxu0 %v811
        %1526 = vmatprep.subr.mxu0 %v820
        %1527 = vmatpush1.msra.mxu0 %v819
        %1528 = vmatprep.subr.mxu0 %v828
        %1529 = vmatpush1.msra.mxu0 %v827
        %1530 = vmatprep.mubr.f32.mxu0 %v235
        %1531 = vmatmul.mubr.f32.gmra.mrb[0].mxu0 %v234
        %v1532 = vpop.f32.mrb[0].mxu0
        %v1533 = vadd.f32 0.0, %v1532
        %v1534 = vpop.f32.mrb[0].mxu0
        %v1535 = vadd.f32 0.0, %v1534
        %1536 = vmatprep.mubr.f32.mxu0 %v237
        %1537 = vmatmul.mubr.f32.gmra.mrb[0].mxu0 %v236
        %v1538 = vpop.f32.mrb[0].mxu0
        %v1539 = vadd.f32 0.0, %v1538
        %v1540 = vpop.f32.mrb[0].mxu0
        %v1541 = vadd.f32 0.0, %v1540
        %1542 = vmatprep.mubr.f32.mxu0 %v239
        %1543 = vmatmul.mubr.f32.gmra.mrb[0].mxu0 %v238
        %v1544 = vpop.f32.mrb[0].mxu0
        %v1545 = vadd.f32 0.0, %v1544
        %v1546 = vpop.f32.mrb[0].mxu0
        %v1547 = vadd.f32 0.0, %v1546
        %1548 = vmatprep.mubr.f32.mxu0 %v241
        %1549 = vmatmul.mubr.f32.gmra.mrb[0].mxu0 %v240
        %v1550 = vpop.f32.mrb[0].mxu0
        %v1551 = vadd.f32 0.0, %v1550
        %v1552 = vpop.f32.mrb[0].mxu0
        %v1553 = vadd.f32 0.0, %v1552
        %1554 = vdwg.mxu0
        %1555 = vmatprep.subr.mxu0 %v582
        %1556 = vmatpush1.msra.mxu0 %v581
        %1557 = vmatprep.subr.mxu0 %v590
        %1558 = vmatpush1.msra.mxu0 %v589
        %1559 = vmatprep.subr.mxu0 %v598
        %1560 = vmatpush1.msra.mxu0 %v597
        %1561 = vmatprep.subr.mxu0 %v606
        %1562 = vmatpush1.msra.mxu0 %v605
        %1563 = vmatprep.subr.mxu0 %v614
        %1564 = vmatpush1.msra.mxu0 %v613
        %1565 = vmatprep.subr.mxu0 %v622
        %1566 = vmatpush1.msra.mxu0 %v621
        %1567 = vmatprep.subr.mxu0 %v630
        %1568 = vmatpush1.msra.mxu0 %v629
        %1569 = vmatprep.subr.mxu0 %v638
        %1570 = vmatpush1.msra.mxu0 %v637
        %1571 = vmatprep.subr.mxu0 %v646
        %1572 = vmatpush1.msra.mxu0 %v645
        %1573 = vmatprep.subr.mxu0 %v654
        %1574 = vmatpush1.msra.mxu0 %v653
        %1575 = vmatprep.subr.mxu0 %v662
        %1576 = vmatpush1.msra.mxu0 %v661
        %1577 = vmatprep.subr.mxu0 %v670
        %1578 = vmatpush1.msra.mxu0 %v669
        %1579 = vmatprep.subr.mxu0 %v678
        %1580 = vmatpush1.msra.mxu0 %v677
        %1581 = vmatprep.subr.mxu0 %v686
        %1582 = vmatpush1.msra.mxu0 %v685
        %1583 = vmatprep.subr.mxu0 %v694
        %1584 = vmatpush1.msra.mxu0 %v693
        %1585 = vmatprep.subr.mxu0 %v702
        %1586 = vmatpush1.msra.mxu0 %v701
        %1587 = vmatprep.subr.mxu0 %v710
        %1588 = vmatpush1.msra.mxu0 %v709
        %1589 = vmatprep.subr.mxu0 %v718
        %1590 = vmatpush1.msra.mxu0 %v717
        %1591 = vmatprep.subr.mxu0 %v726
        %1592 = vmatpush1.msra.mxu0 %v725
        %1593 = vmatprep.subr.mxu0 %v734
        %1594 = vmatpush1.msra.mxu0 %v733
        %1595 = vmatprep.subr.mxu0 %v742
        %1596 = vmatpush1.msra.mxu0 %v741
        %1597 = vmatprep.subr.mxu0 %v750
        %1598 = vmatpush1.msra.mxu0 %v749
        %1599 = vmatprep.subr.mxu0 %v758
        %1600 = vmatpush1.msra.mxu0 %v757
        %1601 = vmatprep.subr.mxu0 %v766
        %1602 = vmatpush1.msra.mxu0 %v765
        %1603 = vmatprep.subr.mxu0 %v774
        %1604 = vmatpush1.msra.mxu0 %v773
        %1605 = vmatprep.subr.mxu0 %v782
        %1606 = vmatpush1.msra.mxu0 %v781
        %1607 = vmatprep.subr.mxu0 %v790
        %1608 = vmatpush1.msra.mxu0 %v789
        %1609 = vmatprep.subr.mxu0 %v798
        %1610 = vmatpush1.msra.mxu0 %v797
        %1611 = vmatprep.subr.mxu0 %v806
        %1612 = vmatpush1.msra.mxu0 %v805
        %1613 = vmatprep.subr.mxu0 %v814
        %1614 = vmatpush1.msra.mxu0 %v813
        %1615 = vmatprep.subr.mxu0 %v822
        %1616 = vmatpush1.msra.mxu0 %v821
        %1617 = vmatprep.subr.mxu0 %v830
        %1618 = vmatpush1.msra.mxu0 %v829
        %1619 = vmatprep.mubr.f32.mxu0 %v235
        %1620 = vmatmul.mubr.f32.gmra.mrb[0].mxu0 %v234
        %v1621 = vpop.f32.mrb[0].mxu0
        %v1622 = vadd.f32 0.0, %v1621
        %v1623 = vpop.f32.mrb[0].mxu0
        %v1624 = vadd.f32 0.0, %v1623
        %1625 = vmatprep.mubr.f32.mxu0 %v237
        %1626 = vmatmul.mubr.f32.gmra.mrb[0].mxu0 %v236
        %v1627 = vpop.f32.mrb[0].mxu0
        %v1628 = vadd.f32 0.0, %v1627
        %v1629 = vpop.f32.mrb[0].mxu0
        %v1630 = vadd.f32 0.0, %v1629
        %1631 = vmatprep.mubr.f32.mxu0 %v239
        %1632 = vmatmul.mubr.f32.gmra.mrb[0].mxu0 %v238
        %v1633 = vpop.f32.mrb[0].mxu0
        %v1634 = vadd.f32 0.0, %v1633
        %v1635 = vpop.f32.mrb[0].mxu0
        %v1636 = vadd.f32 0.0, %v1635
        %1637 = vmatprep.mubr.f32.mxu0 %v241
        %1638 = vmatmul.mubr.f32.gmra.mrb[0].mxu0 %v240
        %v1639 = vpop.f32.mrb[0].mxu0
        %v1640 = vadd.f32 0.0, %v1639
        %v1641 = vpop.f32.mrb[0].mxu0
        %v1642 = vadd.f32 0.0, %v1641
        %1643 = vdwg.mxu0
        %1644 = vmatprep.subr.mxu0 %v584
        %1645 = vmatpush1.msra.mxu0 %v583
        %1646 = vmatprep.subr.mxu0 %v592
        %1647 = vmatpush1.msra.mxu0 %v591
        %1648 = vmatprep.subr.mxu0 %v600
        %1649 = vmatpush1.msra.mxu0 %v599
        %1650 = vmatprep.subr.mxu0 %v608
        %1651 = vmatpush1.msra.mxu0 %v607
        %1652 = vmatprep.subr.mxu0 %v616
        %1653 = vmatpush1.msra.mxu0 %v615
        %1654 = vmatprep.subr.mxu0 %v624
        %1655 = vmatpush1.msra.mxu0 %v623
        %1656 = vmatprep.subr.mxu0 %v632
        %1657 = vmatpush1.msra.mxu0 %v631
        %1658 = vmatprep.subr.mxu0 %v640
        %1659 = vmatpush1.msra.mxu0 %v639
        %1660 = vmatprep.subr.mxu0 %v648
        %1661 = vmatpush1.msra.mxu0 %v647
        %1662 = vmatprep.subr.mxu0 %v656
        %1663 = vmatpush1.msra.mxu0 %v655
        %1664 = vmatprep.subr.mxu0 %v664
        %1665 = vmatpush1.msra.mxu0 %v663
        %1666 = vmatprep.subr.mxu0 %v672
        %1667 = vmatpush1.msra.mxu0 %v671
        %1668 = vmatprep.subr.mxu0 %v680
        %1669 = vmatpush1.msra.mxu0 %v679
        %1670 = vmatprep.subr.mxu0 %v688
        %1671 = vmatpush1.msra.mxu0 %v687
        %1672 = vmatprep.subr.mxu0 %v696
        %1673 = vmatpush1.msra.mxu0 %v695
        %1674 = vmatprep.subr.mxu0 %v704
        %1675 = vmatpush1.msra.mxu0 %v703
        %1676 = vmatprep.subr.mxu0 %v712
        %1677 = vmatpush1.msra.mxu0 %v711
        %1678 = vmatprep.subr.mxu0 %v720
        %1679 = vmatpush1.msra.mxu0 %v719
        %1680 = vmatprep.subr.mxu0 %v728
        %1681 = vmatpush1.msra.mxu0 %v727
        %1682 = vmatprep.subr.mxu0 %v736
        %1683 = vmatpush1.msra.mxu0 %v735
        %1684 = vmatprep.subr.mxu0 %v744
        %1685 = vmatpush1.msra.mxu0 %v743
        %1686 = vmatprep.subr.mxu0 %v752
        %1687 = vmatpush1.msra.mxu0 %v751
        %1688 = vmatprep.subr.mxu0 %v760
        %1689 = vmatpush1.msra.mxu0 %v759
        %1690 = vmatprep.subr.mxu0 %v768
        %1691 = vmatpush1.msra.mxu0 %v767
        %1692 = vmatprep.subr.mxu0 %v776
        %1693 = vmatpush1.msra.mxu0 %v775
        %1694 = vmatprep.subr.mxu0 %v784
        %1695 = vmatpush1.msra.mxu0 %v783
        %1696 = vmatprep.subr.mxu0 %v792
        %1697 = vmatpush1.msra.mxu0 %v791
        %1698 = vmatprep.subr.mxu0 %v800
        %1699 = vmatpush1.msra.mxu0 %v799
        %1700 = vmatprep.subr.mxu0 %v808
        %1701 = vmatpush1.msra.mxu0 %v807
        %1702 = vmatprep.subr.mxu0 %v816
        %1703 = vmatpush1.msra.mxu0 %v815
        %1704 = vmatprep.subr.mxu0 %v824
        %1705 = vmatpush1.msra.mxu0 %v823
        %1706 = vmatprep.subr.mxu0 %v832
        %1707 = vmatpush1.msra.mxu0 %v831
        %1708 = vmatprep.mubr.f32.mxu0 %v235
        %1709 = vmatmul.mubr.f32.gmra.mrb[0].mxu0 %v234
        %v1710 = vpop.f32.mrb[0].mxu0
        %v1711 = vadd.f32 0.0, %v1710
        %v1712 = vpop.f32.mrb[0].mxu0
        %v1713 = vadd.f32 0.0, %v1712
        %1714 = vmatprep.mubr.f32.mxu0 %v237
        %1715 = vmatmul.mubr.f32.gmra.mrb[0].mxu0 %v236
        %v1716 = vpop.f32.mrb[0].mxu0
        %v1717 = vadd.f32 0.0, %v1716
        %v1718 = vpop.f32.mrb[0].mxu0
        %v1719 = vadd.f32 0.0, %v1718
        %1720 = vmatprep.mubr.f32.mxu0 %v239
        %1721 = vmatmul.mubr.f32.gmra.mrb[0].mxu0 %v238
        %v1722 = vpop.f32.mrb[0].mxu0
        %v1723 = vadd.f32 0.0, %v1722
        %v1724 = vpop.f32.mrb[0].mxu0
        %v1725 = vadd.f32 0.0, %v1724
        %1726 = vmatprep.mubr.f32.mxu0 %v241
        %1727 = vmatmul.mubr.f32.gmra.mrb[0].mxu0 %v240
        %v1728 = vpop.f32.mrb[0].mxu0
        %v1729 = vadd.f32 0.0, %v1728
        %v1730 = vpop.f32.mrb[0].mxu0
        %v1731 = vadd.f32 0.0, %v1730
        %1732 = vdwg.mxu0
        %1733 = vmatprep.subr.mxu0 %v1122
        %1734 = vmatpush1.msra.mxu0 %v1121
        %1735 = vmatprep.subr.mxu0 %v1130
        %1736 = vmatpush1.msra.mxu0 %v1129
        %1737 = vmatprep.subr.mxu0 %v1138
        %1738 = vmatpush1.msra.mxu0 %v1137
        %1739 = vmatprep.subr.mxu0 %v1146
        %1740 = vmatpush1.msra.mxu0 %v1145
        %1741 = vmatprep.subr.mxu0 %v1154
        %1742 = vmatpush1.msra.mxu0 %v1153
        %1743 = vmatprep.subr.mxu0 %v1162
        %1744 = vmatpush1.msra.mxu0 %v1161
        %1745 = vmatprep.subr.mxu0 %v1170
        %1746 = vmatpush1.msra.mxu0 %v1169
        %1747 = vmatprep.subr.mxu0 %v1178
        %1748 = vmatpush1.msra.mxu0 %v1177
        %1749 = vmatprep.subr.mxu0 %v1186
        %1750 = vmatpush1.msra.mxu0 %v1185
        %1751 = vmatprep.subr.mxu0 %v1194
        %1752 = vmatpush1.msra.mxu0 %v1193
        %1753 = vmatprep.subr.mxu0 %v1202
        %1754 = vmatpush1.msra.mxu0 %v1201
        %1755 = vmatprep.subr.mxu0 %v1210
        %1756 = vmatpush1.msra.mxu0 %v1209
        %1757 = vmatprep.subr.mxu0 %v1218
        %1758 = vmatpush1.msra.mxu0 %v1217
        %1759 = vmatprep.subr.mxu0 %v1226
        %1760 = vmatpush1.msra.mxu0 %v1225
        %1761 = vmatprep.subr.mxu0 %v1234
        %1762 = vmatpush1.msra.mxu0 %v1233
        %1763 = vmatprep.subr.mxu0 %v1242
        %1764 = vmatpush1.msra.mxu0 %v1241
        %1765 = vmatprep.subr.mxu0 %v1250
        %1766 = vmatpush1.msra.mxu0 %v1249
        %1767 = vmatprep.subr.mxu0 %v1258
        %1768 = vmatpush1.msra.mxu0 %v1257
        %1769 = vmatprep.subr.mxu0 %v1266
        %1770 = vmatpush1.msra.mxu0 %v1265
        %1771 = vmatprep.subr.mxu0 %v1274
        %1772 = vmatpush1.msra.mxu0 %v1273
        %1773 = vmatprep.subr.mxu0 %v1282
        %1774 = vmatpush1.msra.mxu0 %v1281
        %1775 = vmatprep.subr.mxu0 %v1290
        %1776 = vmatpush1.msra.mxu0 %v1289
        %1777 = vmatprep.subr.mxu0 %v1298
        %1778 = vmatpush1.msra.mxu0 %v1297
        %1779 = vmatprep.subr.mxu0 %v1306
        %1780 = vmatpush1.msra.mxu0 %v1305
        %1781 = vmatprep.subr.mxu0 %v1314
        %1782 = vmatpush1.msra.mxu0 %v1313
        %1783 = vmatprep.subr.mxu0 %v1322
        %1784 = vmatpush1.msra.mxu0 %v1321
        %1785 = vmatprep.subr.mxu0 %v1330
        %1786 = vmatpush1.msra.mxu0 %v1329
        %1787 = vmatprep.subr.mxu0 %v1338
        %1788 = vmatpush1.msra.mxu0 %v1337
        %1789 = vmatprep.subr.mxu0 %v1346
        %1790 = vmatpush1.msra.mxu0 %v1345
        %1791 = vmatprep.subr.mxu0 %v1354
        %1792 = vmatpush1.msra.mxu0 %v1353
        %1793 = vmatprep.subr.mxu0 %v1362
        %1794 = vmatpush1.msra.mxu0 %v1361
        %1795 = vmatprep.subr.mxu0 %v1370
        %1796 = vmatpush1.msra.mxu0 %v1369
        %1797 = vmatprep.mubr.f32.mxu0 %v247
        %1798 = vmatmul.mubr.f32.gmra.mrb[0].mxu0 %v246
        %v1799 = vpop.f32.mrb[0].mxu0
        %v1800 = vadd.f32 0.0, %v1799
        %v1801 = vpop.f32.mrb[0].mxu0
        %v1802 = vadd.f32 0.0, %v1801
        %1803 = vmatprep.mubr.f32.mxu0 %v249
        %1804 = vmatmul.mubr.f32.gmra.mrb[0].mxu0 %v248
        %v1805 = vpop.f32.mrb[0].mxu0
        %v1806 = vadd.f32 0.0, %v1805
        %v1807 = vpop.f32.mrb[0].mxu0
        %v1808 = vadd.f32 0.0, %v1807
        %1809 = vmatprep.mubr.f32.mxu0 %v251
        %1810 = vmatmul.mubr.f32.gmra.mrb[0].mxu0 %v250
        %v1811 = vpop.f32.mrb[0].mxu0
        %v1812 = vadd.f32 0.0, %v1811
        %v1813 = vpop.f32.mrb[0].mxu0
        %v1814 = vadd.f32 0.0, %v1813
        %1815 = vmatprep.mubr.f32.mxu0 %v253
        %1816 = vmatmul.mubr.f32.gmra.mrb[0].mxu0 %v252
        %v1817 = vpop.f32.mrb[0].mxu0
        %v1818 = vadd.f32 0.0, %v1817
        %v1819 = vpop.f32.mrb[0].mxu0
        %v1820 = vadd.f32 0.0, %v1819
        %1821 = vdwg.mxu0
        %1822 = vmatprep.subr.mxu0 %v1124
        %1823 = vmatpush1.msra.mxu0 %v1123
        %1824 = vmatprep.subr.mxu0 %v1132
        %1825 = vmatpush1.msra.mxu0 %v1131
        %1826 = vmatprep.subr.mxu0 %v1140
        %1827 = vmatpush1.msra.mxu0 %v1139
        %1828 = vmatprep.subr.mxu0 %v1148
        %1829 = vmatpush1.msra.mxu0 %v1147
        %1830 = vmatprep.subr.mxu0 %v1156
        %1831 = vmatpush1.msra.mxu0 %v1155
        %1832 = vmatprep.subr.mxu0 %v1164
        %1833 = vmatpush1.msra.mxu0 %v1163
        %1834 = vmatprep.subr.mxu0 %v1172
        %1835 = vmatpush1.msra.mxu0 %v1171
        %1836 = vmatprep.subr.mxu0 %v1180
        %1837 = vmatpush1.msra.mxu0 %v1179
        %1838 = vmatprep.subr.mxu0 %v1188
        %1839 = vmatpush1.msra.mxu0 %v1187
        %1840 = vmatprep.subr.mxu0 %v1196
        %1841 = vmatpush1.msra.mxu0 %v1195
        %1842 = vmatprep.subr.mxu0 %v1204
        %1843 = vmatpush1.msra.mxu0 %v1203
        %1844 = vmatprep.subr.mxu0 %v1212
        %1845 = vmatpush1.msra.mxu0 %v1211
        %1846 = vmatprep.subr.mxu0 %v1220
        %1847 = vmatpush1.msra.mxu0 %v1219
        %1848 = vmatprep.subr.mxu0 %v1228
        %1849 = vmatpush1.msra.mxu0 %v1227
        %1850 = vmatprep.subr.mxu0 %v1236
        %1851 = vmatpush1.msra.mxu0 %v1235
        %1852 = vmatprep.subr.mxu0 %v1244
        %1853 = vmatpush1.msra.mxu0 %v1243
        %1854 = vmatprep.subr.mxu0 %v1252
        %1855 = vmatpush1.msra.mxu0 %v1251
        %1856 = vmatprep.subr.mxu0 %v1260
        %1857 = vmatpush1.msra.mxu0 %v1259
        %1858 = vmatprep.subr.mxu0 %v1268
        %1859 = vmatpush1.msra.mxu0 %v1267
        %1860 = vmatprep.subr.mxu0 %v1276
        %1861 = vmatpush1.msra.mxu0 %v1275
        %1862 = vmatprep.subr.mxu0 %v1284
        %1863 = vmatpush1.msra.mxu0 %v1283
        %1864 = vmatprep.subr.mxu0 %v1292
        %1865 = vmatpush1.msra.mxu0 %v1291
        %1866 = vmatprep.subr.mxu0 %v1300
        %1867 = vmatpush1.msra.mxu0 %v1299
        %1868 = vmatprep.subr.mxu0 %v1308
        %1869 = vmatpush1.msra.mxu0 %v1307
        %1870 = vmatprep.subr.mxu0 %v1316
        %1871 = vmatpush1.msra.mxu0 %v1315
        %1872 = vmatprep.subr.mxu0 %v1324
        %1873 = vmatpush1.msra.mxu0 %v1323
        %1874 = vmatprep.subr.mxu0 %v1332
        %1875 = vmatpush1.msra.mxu0 %v1331
        %1876 = vmatprep.subr.mxu0 %v1340
        %1877 = vmatpush1.msra.mxu0 %v1339
        %1878 = vmatprep.subr.mxu0 %v1348
        %1879 = vmatpush1.msra.mxu0 %v1347
        %1880 = vmatprep.subr.mxu0 %v1356
        %1881 = vmatpush1.msra.mxu0 %v1355
        %1882 = vmatprep.subr.mxu0 %v1364
        %1883 = vmatpush1.msra.mxu0 %v1363
        %1884 = vmatprep.subr.mxu0 %v1372
        %1885 = vmatpush1.msra.mxu0 %v1371
        %1886 = vmatprep.mubr.f32.mxu0 %v247
        %1887 = vmatmul.mubr.f32.gmra.mrb[0].mxu0 %v246
        %v1888 = vpop.f32.mrb[0].mxu0
        %v1889 = vadd.f32 0.0, %v1888
        %v1890 = vpop.f32.mrb[0].mxu0
        %v1891 = vadd.f32 0.0, %v1890
        %1892 = vmatprep.mubr.f32.mxu0 %v249
        %1893 = vmatmul.mubr.f32.gmra.mrb[0].mxu0 %v248
        %v1894 = vpop.f32.mrb[0].mxu0
        %v1895 = vadd.f32 0.0, %v1894
        %v1896 = vpop.f32.mrb[0].mxu0
        %v1897 = vadd.f32 0.0, %v1896
        %1898 = vmatprep.mubr.f32.mxu0 %v251
        %1899 = vmatmul.mubr.f32.gmra.mrb[0].mxu0 %v250
        %v1900 = vpop.f32.mrb[0].mxu0
        %v1901 = vadd.f32 0.0, %v1900
        %v1902 = vpop.f32.mrb[0].mxu0
        %v1903 = vadd.f32 0.0, %v1902
        %1904 = vmatprep.mubr.f32.mxu0 %v253
        %1905 = vmatmul.mubr.f32.gmra.mrb[0].mxu0 %v252
        %v1906 = vpop.f32.mrb[0].mxu0
        %v1907 = vadd.f32 0.0, %v1906
        %v1908 = vpop.f32.mrb[0].mxu0
        %v1909 = vadd.f32 0.0, %v1908
        %1910 = vdwg.mxu0
        %1911 = vmatprep.subr.mxu0 %v1126
        %1912 = vmatpush1.msra.mxu0 %v1125
        %1913 = vmatprep.subr.mxu0 %v1134
        %1914 = vmatpush1.msra.mxu0 %v1133
        %1915 = vmatprep.subr.mxu0 %v1142
        %1916 = vmatpush1.msra.mxu0 %v1141
        %1917 = vmatprep.subr.mxu0 %v1150
        %1918 = vmatpush1.msra.mxu0 %v1149
        %1919 = vmatprep.subr.mxu0 %v1158
        %1920 = vmatpush1.msra.mxu0 %v1157
        %1921 = vmatprep.subr.mxu0 %v1166
        %1922 = vmatpush1.msra.mxu0 %v1165
        %1923 = vmatprep.subr.mxu0 %v1174
        %1924 = vmatpush1.msra.mxu0 %v1173
        %1925 = vmatprep.subr.mxu0 %v1182
        %1926 = vmatpush1.msra.mxu0 %v1181
        %1927 = vmatprep.subr.mxu0 %v1190
        %1928 = vmatpush1.msra.mxu0 %v1189
        %1929 = vmatprep.subr.mxu0 %v1198
        %1930 = vmatpush1.msra.mxu0 %v1197
        %1931 = vmatprep.subr.mxu0 %v1206
        %1932 = vmatpush1.msra.mxu0 %v1205
        %1933 = vmatprep.subr.mxu0 %v1214
        %1934 = vmatpush1.msra.mxu0 %v1213
        %1935 = vmatprep.subr.mxu0 %v1222
        %1936 = vmatpush1.msra.mxu0 %v1221
        %1937 = vmatprep.subr.mxu0 %v1230
        %1938 = vmatpush1.msra.mxu0 %v1229
        %1939 = vmatprep.subr.mxu0 %v1238
        %1940 = vmatpush1.msra.mxu0 %v1237
        %1941 = vmatprep.subr.mxu0 %v1246
        %1942 = vmatpush1.msra.mxu0 %v1245
        %1943 = vmatprep.subr.mxu0 %v1254
        %1944 = vmatpush1.msra.mxu0 %v1253
        %1945 = vmatprep.subr.mxu0 %v1262
        %1946 = vmatpush1.msra.mxu0 %v1261
        %1947 = vmatprep.subr.mxu0 %v1270
        %1948 = vmatpush1.msra.mxu0 %v1269
        %1949 = vmatprep.subr.mxu0 %v1278
        %1950 = vmatpush1.msra.mxu0 %v1277
        %1951 = vmatprep.subr.mxu0 %v1286
        %1952 = vmatpush1.msra.mxu0 %v1285
        %1953 = vmatprep.subr.mxu0 %v1294
        %1954 = vmatpush1.msra.mxu0 %v1293
        %1955 = vmatprep.subr.mxu0 %v1302
        %1956 = vmatpush1.msra.mxu0 %v1301
        %1957 = vmatprep.subr.mxu0 %v1310
        %1958 = vmatpush1.msra.mxu0 %v1309
        %1959 = vmatprep.subr.mxu0 %v1318
        %1960 = vmatpush1.msra.mxu0 %v1317
        %1961 = vmatprep.subr.mxu0 %v1326
        %1962 = vmatpush1.msra.mxu0 %v1325
        %1963 = vmatprep.subr.mxu0 %v1334
        %1964 = vmatpush1.msra.mxu0 %v1333
        %1965 = vmatprep.subr.mxu0 %v1342
        %1966 = vmatpush1.msra.mxu0 %v1341
        %1967 = vmatprep.subr.mxu0 %v1350
        %1968 = vmatpush1.msra.mxu0 %v1349
        %1969 = vmatprep.subr.mxu0 %v1358
        %1970 = vmatpush1.msra.mxu0 %v1357
        %1971 = vmatprep.subr.mxu0 %v1366
        %1972 = vmatpush1.msra.mxu0 %v1365
        %1973 = vmatprep.subr.mxu0 %v1374
        %1974 = vmatpush1.msra.mxu0 %v1373
        %1975 = vmatprep.mubr.f32.mxu0 %v247
        %1976 = vmatmul.mubr.f32.gmra.mrb[0].mxu0 %v246
        %v1977 = vpop.f32.mrb[0].mxu0
        %v1978 = vadd.f32 0.0, %v1977
        %v1979 = vpop.f32.mrb[0].mxu0
        %v1980 = vadd.f32 0.0, %v1979
        %1981 = vmatprep.mubr.f32.mxu0 %v249
        %1982 = vmatmul.mubr.f32.gmra.mrb[0].mxu0 %v248
        %v1983 = vpop.f32.mrb[0].mxu0
        %v1984 = vadd.f32 0.0, %v1983
        %v1985 = vpop.f32.mrb[0].mxu0
        %v1986 = vadd.f32 0.0, %v1985
        %1987 = vmatprep.mubr.f32.mxu0 %v251
        %1988 = vmatmul.mubr.f32.gmra.mrb[0].mxu0 %v250
        %v1989 = vpop.f32.mrb[0].mxu0
        %v1990 = vadd.f32 0.0, %v1989
        %v1991 = vpop.f32.mrb[0].mxu0
        %v1992 = vadd.f32 0.0, %v1991
        %1993 = vmatprep.mubr.f32.mxu0 %v253
        %1994 = vmatmul.mubr.f32.gmra.mrb[0].mxu0 %v252
        %v1995 = vpop.f32.mrb[0].mxu0
        %v1996 = vadd.f32 0.0, %v1995
        %v1997 = vpop.f32.mrb[0].mxu0
        %v1998 = vadd.f32 0.0, %v1997
        %1999 = vdwg.mxu0
        %2000 = vmatprep.subr.mxu0 %v1128
        %2001 = vmatpush1.msra.mxu0 %v1127
        %2002 = vmatprep.subr.mxu0 %v1136
        %2003 = vmatpush1.msra.mxu0 %v1135
        %2004 = vmatprep.subr.mxu0 %v1144
        %2005 = vmatpush1.msra.mxu0 %v1143
        %2006 = vmatprep.subr.mxu0 %v1152
        %2007 = vmatpush1.msra.mxu0 %v1151
        %2008 = vmatprep.subr.mxu0 %v1160
        %2009 = vmatpush1.msra.mxu0 %v1159
        %2010 = vmatprep.subr.mxu0 %v1168
        %2011 = vmatpush1.msra.mxu0 %v1167
        %2012 = vmatprep.subr.mxu0 %v1176
        %2013 = vmatpush1.msra.mxu0 %v1175
        %2014 = vmatprep.subr.mxu0 %v1184
        %2015 = vmatpush1.msra.mxu0 %v1183
        %2016 = vmatprep.subr.mxu0 %v1192
        %2017 = vmatpush1.msra.mxu0 %v1191
        %2018 = vmatprep.subr.mxu0 %v1200
        %2019 = vmatpush1.msra.mxu0 %v1199
        %2020 = vmatprep.subr.mxu0 %v1208
        %2021 = vmatpush1.msra.mxu0 %v1207
        %2022 = vmatprep.subr.mxu0 %v1216
        %2023 = vmatpush1.msra.mxu0 %v1215
        %2024 = vmatprep.subr.mxu0 %v1224
        %2025 = vmatpush1.msra.mxu0 %v1223
        %2026 = vmatprep.subr.mxu0 %v1232
        %2027 = vmatpush1.msra.mxu0 %v1231
        %2028 = vmatprep.subr.mxu0 %v1240
        %2029 = vmatpush1.msra.mxu0 %v1239
        %2030 = vmatprep.subr.mxu0 %v1248
        %2031 = vmatpush1.msra.mxu0 %v1247
        %2032 = vmatprep.subr.mxu0 %v1256
        %2033 = vmatpush1.msra.mxu0 %v1255
        %2034 = vmatprep.subr.mxu0 %v1264
        %2035 = vmatpush1.msra.mxu0 %v1263
        %2036 = vmatprep.subr.mxu0 %v1272
        %2037 = vmatpush1.msra.mxu0 %v1271
        %2038 = vmatprep.subr.mxu0 %v1280
        %2039 = vmatpush1.msra.mxu0 %v1279
        %2040 = vmatprep.subr.mxu0 %v1288
        %2041 = vmatpush1.msra.mxu0 %v1287
        %2042 = vmatprep.subr.mxu0 %v1296
        %2043 = vmatpush1.msra.mxu0 %v1295
        %2044 = vmatprep.subr.mxu0 %v1304
        %2045 = vmatpush1.msra.mxu0 %v1303
        %2046 = vmatprep.subr.mxu0 %v1312
        %2047 = vmatpush1.msra.mxu0 %v1311
        %2048 = vmatprep.subr.mxu0 %v1320
        %2049 = vmatpush1.msra.mxu0 %v1319
        %2050 = vmatprep.subr.mxu0 %v1328
        %2051 = vmatpush1.msra.mxu0 %v1327
        %2052 = vmatprep.subr.mxu0 %v1336
        %2053 = vmatpush1.msra.mxu0 %v1335
        %2054 = vmatprep.subr.mxu0 %v1344
        %2055 = vmatpush1.msra.mxu0 %v1343
        %2056 = vmatprep.subr.mxu0 %v1352
        %2057 = vmatpush1.msra.mxu0 %v1351
        %2058 = vmatprep.subr.mxu0 %v1360
        %2059 = vmatpush1.msra.mxu0 %v1359
        %2060 = vmatprep.subr.mxu0 %v1368
        %2061 = vmatpush1.msra.mxu0 %v1367
        %2062 = vmatprep.subr.mxu0 %v1376
        %2063 = vmatpush1.msra.mxu0 %v1375
        %2064 = vmatprep.mubr.f32.mxu0 %v247
        %2065 = vmatmul.mubr.f32.gmra.mrb[0].mxu0 %v246
        %v2066 = vpop.f32.mrb[0].mxu0
        %v2067 = vadd.f32 0.0, %v2066
        %v2068 = vpop.f32.mrb[0].mxu0
        %v2069 = vadd.f32 0.0, %v2068
        %2070 = vmatprep.mubr.f32.mxu0 %v249
        %2071 = vmatmul.mubr.f32.gmra.mrb[0].mxu0 %v248
        %v2072 = vpop.f32.mrb[0].mxu0
        %v2073 = vadd.f32 0.0, %v2072
        %v2074 = vpop.f32.mrb[0].mxu0
        %v2075 = vadd.f32 0.0, %v2074
        %2076 = vmatprep.mubr.f32.mxu0 %v251
        %2077 = vmatmul.mubr.f32.gmra.mrb[0].mxu0 %v250
        %v2078 = vpop.f32.mrb[0].mxu0
        %v2079 = vadd.f32 0.0, %v2078
        %v2080 = vpop.f32.mrb[0].mxu0
        %v2081 = vadd.f32 0.0, %v2080
        %2082 = vmatprep.mubr.f32.mxu0 %v253
        %2083 = vmatmul.mubr.f32.gmra.mrb[0].mxu0 %v252
        %v2084 = vpop.f32.mrb[0].mxu0
        %v2085 = vadd.f32 0.0, %v2084
        %v2086 = vpop.f32.mrb[0].mxu0
        %v2087 = vadd.f32 0.0, %v2086
        %2088 = vdwg.mxu0
        %v2089 = vmul.f32 %v1444, %v1800
        %v2090 = vmul.f32 %v1446, %v1802
        %v2091 = vmul.f32 %v1533, %v1889
        %v2092 = vmul.f32 %v1535, %v1891
        %v2093 = vmul.f32 %v1622, %v1978
        %v2094 = vmul.f32 %v1624, %v1980
        %v2095 = vmul.f32 %v1711, %v2067
        %v2096 = vmul.f32 %v1713, %v2069
        %v2097 = vmul.f32 %v1450, %v1806
        %v2098 = vmul.f32 %v1452, %v1808
        %v2099 = vmul.f32 %v1539, %v1895
        %v2100 = vmul.f32 %v1541, %v1897
        %v2101 = vmul.f32 %v1628, %v1984
        %v2102 = vmul.f32 %v1630, %v1986
        %v2103 = vmul.f32 %v1717, %v2073
        %v2104 = vmul.f32 %v1719, %v2075
        %v2105 = vmul.f32 %v1456, %v1812
        %v2106 = vmul.f32 %v1458, %v1814
        %v2107 = vmul.f32 %v1545, %v1901
        %v2108 = vmul.f32 %v1547, %v1903
        %v2109 = vmul.f32 %v1634, %v1990
        %v2110 = vmul.f32 %v1636, %v1992
        %v2111 = vmul.f32 %v1723, %v2079
        %v2112 = vmul.f32 %v1725, %v2081
        %v2113 = vmul.f32 %v1462, %v1818
        %v2114 = vmul.f32 %v1464, %v1820
        %v2115 = vmul.f32 %v1551, %v1907
        %v2116 = vmul.f32 %v1553, %v1909
        %v2117 = vmul.f32 %v1640, %v1996
        %v2118 = vmul.f32 %v1642, %v1998
        %v2119 = vmul.f32 %v1729, %v2085
        %v2120 = vmul.f32 %v1731, %v2087
        %v2121 = vadd.f32 %v2089, %v2097
        %v2122 = vadd.f32 %v2121, %v2105
        %v2123 = vadd.f32 %v2122, %v2113
        %v2124 = vrot.slane %v2123, 4
        %v2125 = vadd.f32 %v2123, %v2124
        %v2126 = vrot.slane %v2125, 2
        %v2127 = vadd.f32 %v2125, %v2126
        %v2128 = vrot.slane %v2127, 1
        %v2129 = vadd.f32 %v2127, %v2128
        %v2130 = vadd.f32 %v2090, %v2098
        %v2131 = vadd.f32 %v2130, %v2106
        %v2132 = vadd.f32 %v2131, %v2114
        %v2133 = vrot.slane %v2132, 4
        %v2134 = vadd.f32 %v2132, %v2133
        %v2135 = vrot.slane %v2134, 2
        %v2136 = vadd.f32 %v2134, %v2135
        %v2137 = vrot.slane %v2136, 1
        %v2138 = vadd.f32 %v2136, %v2137
        %v2139 = vadd.f32 %v2091, %v2099
        %v2140 = vadd.f32 %v2139, %v2107
        %v2141 = vadd.f32 %v2140, %v2115
        %v2142 = vrot.slane %v2141, 4
        %v2143 = vadd.f32 %v2141, %v2142
        %v2144 = vrot.slane %v2143, 2
        %v2145 = vadd.f32 %v2143, %v2144
        %v2146 = vrot.slane %v2145, 1
        %v2147 = vadd.f32 %v2145, %v2146
        %v2148 = vadd.f32 %v2092, %v2100
        %v2149 = vadd.f32 %v2148, %v2108
        %v2150 = vadd.f32 %v2149, %v2116
        %v2151 = vrot.slane %v2150, 4
        %v2152 = vadd.f32 %v2150, %v2151
        %v2153 = vrot.slane %v2152, 2
        %v2154 = vadd.f32 %v2152, %v2153
        %v2155 = vrot.slane %v2154, 1
        %v2156 = vadd.f32 %v2154, %v2155
        %v2157 = vadd.f32 %v2093, %v2101
        %v2158 = vadd.f32 %v2157, %v2109
        %v2159 = vadd.f32 %v2158, %v2117
        %v2160 = vrot.slane %v2159, 4
        %v2161 = vadd.f32 %v2159, %v2160
        %v2162 = vrot.slane %v2161, 2
        %v2163 = vadd.f32 %v2161, %v2162
        %v2164 = vrot.slane %v2163, 1
        %v2165 = vadd.f32 %v2163, %v2164
        %v2166 = vadd.f32 %v2094, %v2102
        %v2167 = vadd.f32 %v2166, %v2110
        %v2168 = vadd.f32 %v2167, %v2118
        %v2169 = vrot.slane %v2168, 4
        %v2170 = vadd.f32 %v2168, %v2169
        %v2171 = vrot.slane %v2170, 2
        %v2172 = vadd.f32 %v2170, %v2171
        %v2173 = vrot.slane %v2172, 1
        %v2174 = vadd.f32 %v2172, %v2173
        %v2175 = vadd.f32 %v2095, %v2103
        %v2176 = vadd.f32 %v2175, %v2111
        %v2177 = vadd.f32 %v2176, %v2119
        %v2178 = vrot.slane %v2177, 4
        %v2179 = vadd.f32 %v2177, %v2178
        %v2180 = vrot.slane %v2179, 2
        %v2181 = vadd.f32 %v2179, %v2180
        %v2182 = vrot.slane %v2181, 1
        %v2183 = vadd.f32 %v2181, %v2182
        %v2184 = vadd.f32 %v2096, %v2104
        %v2185 = vadd.f32 %v2184, %v2112
        %v2186 = vadd.f32 %v2185, %v2120
        %v2187 = vrot.slane %v2186, 4
        %v2188 = vadd.f32 %v2186, %v2187
        %v2189 = vrot.slane %v2188, 2
        %v2190 = vadd.f32 %v2188, %v2189
        %v2191 = vrot.slane %v2190, 1
        %v2192 = vadd.f32 %v2190, %v2191
        %v2193 = vmax.f32 %v2129, -10.0
        %v2194 = vmax.f32 %v2138, -10.0
        %v2195 = vmax.f32 %v2147, -10.0
        %v2196 = vmax.f32 %v2156, -10.0
        %v2197 = vmax.f32 %v2165, -10.0
        %v2198 = vmax.f32 %v2174, -10.0
        %v2199 = vmax.f32 %v2183, -10.0
        %v2200 = vmax.f32 %v2192, -10.0
        %v2201 = vmin.f32 %v2193, 10.0
        %v2202 = vmin.f32 %v2194, 10.0
        %v2203 = vmin.f32 %v2195, 10.0
        %v2204 = vmin.f32 %v2196, 10.0
        %v2205 = vmin.f32 %v2197, 10.0
        %v2206 = vmin.f32 %v2198, 10.0
        %v2207 = vmin.f32 %v2199, 10.0
        %v2208 = vmin.f32 %v2200, 10.0
        %v2209 = vlaneseq
        %v2210 = vand.u32 %v2209, 127
        %v2211 = vadd.s32 %v2210, 128
        %v2212 = vadd.s32 %v2210, 256
        %v2213 = vadd.s32 %v2210, 384
        %v2214 = vadd.s32 %v2210, 512
        %v2215 = vadd.s32 %v2210, 640
        %v2216 = vadd.s32 %v2210, 768
        %v2217 = vadd.s32 %v2210, 896
        %v2218 = vstv %s229
        %v2219 = vadd.s32 %v2218, %v2210
        %v2220 = vadd.s32 %v2218, %v2211
        %v2221 = vadd.s32 %v2218, %v2212
        %v2222 = vadd.s32 %v2218, %v2213
        %v2223 = vadd.s32 %v2218, %v2214
        %v2224 = vadd.s32 %v2218, %v2215
        %v2225 = vadd.s32 %v2218, %v2216
        %v2226 = vadd.s32 %v2218, %v2217
        %vm2227 = vcmp.lt.s32.totalorder %v2219, 5
        %vm2228 = vcmp.lt.s32.totalorder %v2220, 5
        %vm2229 = vcmp.lt.s32.totalorder %v2221, 5
        %vm2230 = vcmp.lt.s32.totalorder %v2222, 5
        %vm2231 = vcmp.lt.s32.totalorder %v2223, 5
        %vm2232 = vcmp.lt.s32.totalorder %v2224, 5
        %vm2233 = vcmp.lt.s32.totalorder %v2225, 5
        %vm2234 = vcmp.lt.s32.totalorder %v2226, 5
        %v2235 = vsub.f32 0.0, %v2201
        %v2236 = vsub.f32 0.0, %v2202
        %v2237 = vsub.f32 0.0, %v2203
        %v2238 = vsub.f32 0.0, %v2204
        %v2239 = vsub.f32 0.0, %v2205
        %v2240 = vsub.f32 0.0, %v2206
        %v2241 = vsub.f32 0.0, %v2207
        %v2242 = vsub.f32 0.0, %v2208
        %v2243 = vsel %vm2227, %v2201, %v2235
        %v2244 = vsel %vm2228, %v2202, %v2236
        %v2245 = vsel %vm2229, %v2203, %v2237
        %v2246 = vsel %vm2230, %v2204, %v2238
        %v2247 = vsel %vm2231, %v2205, %v2239
        %v2248 = vsel %vm2232, %v2206, %v2240
        %v2249 = vsel %vm2233, %v2207, %v2241
        %v2250 = vsel %vm2234, %v2208, %v2242
        %v2251 = vmin.f32 %v2243, 0.0
        %v2252 = vmin.f32 %v2244, 0.0
        %v2253 = vmin.f32 %v2245, 0.0
        %v2254 = vmin.f32 %v2246, 0.0
        %v2255 = vmin.f32 %v2247, 0.0
        %v2256 = vmin.f32 %v2248, 0.0
        %v2257 = vmin.f32 %v2249, 0.0
        %v2258 = vmin.f32 %v2250, 0.0
        %v2259 = vand.u32 2147483647, %v2243
        %v2260 = vand.u32 2147483647, %v2244
        %v2261 = vand.u32 2147483647, %v2245
        %v2262 = vand.u32 2147483647, %v2246
        %v2263 = vand.u32 2147483647, %v2247
        %v2264 = vand.u32 2147483647, %v2248
        %v2265 = vand.u32 2147483647, %v2249
        %v2266 = vand.u32 2147483647, %v2250
        %v2267 = vsub.f32 0.0, %v2259
        %v2268 = vsub.f32 0.0, %v2260
        %v2269 = vsub.f32 0.0, %v2261
        %v2270 = vsub.f32 0.0, %v2262
        %v2271 = vsub.f32 0.0, %v2263
        %v2272 = vsub.f32 0.0, %v2264
        %v2273 = vsub.f32 0.0, %v2265
        %v2274 = vsub.f32 0.0, %v2266
        %v2275 = vmul.f32 %v2267, 1.442695
        %v2276 = vpow.pop %v2275
        %v2277 = vmul.f32 %v2268, 1.442695
        %v2278 = vpow.pop %v2277
        %v2279 = vmul.f32 %v2269, 1.442695
        %v2280 = vpow.pop %v2279
        %v2281 = vmul.f32 %v2270, 1.442695
        %v2282 = vpow.pop %v2281
        %v2283 = vmul.f32 %v2271, 1.442695
        %v2284 = vpow.pop %v2283
        %v2285 = vmul.f32 %v2272, 1.442695
        %v2286 = vpow.pop %v2285
        %v2287 = vmul.f32 %v2273, 1.442695
        %v2288 = vpow.pop %v2287
        %v2289 = vmul.f32 %v2274, 1.442695
        %v2290 = vpow.pop %v2289
        %v2291 = vadd.f32 %v2276, 1.0
        %v2292 = vlog2.pop %v2291
        %v2293 = vmul.f32 %v2292, 0.6931472
        %v2294 = vmul.f32 -0.5, %v2276
        %v2295 = vadd.f32 %v2294, 1.0
        %v2296 = vmul.f32 %v2295, %v2276
        %v2297 = vand.u32 2147483647, %v2276
        %vm2298 = vcmp.lt.f32.partialorder %v2297, 0.0004427343
        %v2299 = vsel %vm2298, %v2296, %v2293
        %v2300 = vadd.f32 %v2278, 1.0
        %v2301 = vlog2.pop %v2300
        %v2302 = vmul.f32 %v2301, 0.6931472
        %v2303 = vmul.f32 -0.5, %v2278
        %v2304 = vadd.f32 %v2303, 1.0
        %v2305 = vmul.f32 %v2304, %v2278
        %v2306 = vand.u32 2147483647, %v2278
        %vm2307 = vcmp.lt.f32.partialorder %v2306, 0.0004427343
        %v2308 = vsel %vm2307, %v2305, %v2302
        %v2309 = vadd.f32 %v2280, 1.0
        %v2310 = vlog2.pop %v2309
        %v2311 = vmul.f32 %v2310, 0.6931472
        %v2312 = vmul.f32 -0.5, %v2280
        %v2313 = vadd.f32 %v2312, 1.0
        %v2314 = vmul.f32 %v2313, %v2280
        %v2315 = vand.u32 2147483647, %v2280
        %vm2316 = vcmp.lt.f32.partialorder %v2315, 0.0004427343
        %v2317 = vsel %vm2316, %v2314, %v2311
        %v2318 = vadd.f32 %v2282, 1.0
        %v2319 = vlog2.pop %v2318
        %v2320 = vmul.f32 %v2319, 0.6931472
        %v2321 = vmul.f32 -0.5, %v2282
        %v2322 = vadd.f32 %v2321, 1.0
        %v2323 = vmul.f32 %v2322, %v2282
        %v2324 = vand.u32 2147483647, %v2282
        %vm2325 = vcmp.lt.f32.partialorder %v2324, 0.0004427343
        %v2326 = vsel %vm2325, %v2323, %v2320
        %v2327 = vadd.f32 %v2284, 1.0
        %v2328 = vlog2.pop %v2327
        %v2329 = vmul.f32 %v2328, 0.6931472
        %v2330 = vmul.f32 -0.5, %v2284
        %v2331 = vadd.f32 %v2330, 1.0
        %v2332 = vmul.f32 %v2331, %v2284
        %v2333 = vand.u32 2147483647, %v2284
        %vm2334 = vcmp.lt.f32.partialorder %v2333, 0.0004427343
        %v2335 = vsel %vm2334, %v2332, %v2329
        %v2336 = vadd.f32 %v2286, 1.0
        %v2337 = vlog2.pop %v2336
        %v2338 = vmul.f32 %v2337, 0.6931472
        %v2339 = vmul.f32 -0.5, %v2286
        %v2340 = vadd.f32 %v2339, 1.0
        %v2341 = vmul.f32 %v2340, %v2286
        %v2342 = vand.u32 2147483647, %v2286
        %vm2343 = vcmp.lt.f32.partialorder %v2342, 0.0004427343
        %v2344 = vsel %vm2343, %v2341, %v2338
        %v2345 = vadd.f32 %v2288, 1.0
        %v2346 = vlog2.pop %v2345
        %v2347 = vmul.f32 %v2346, 0.6931472
        %v2348 = vmul.f32 -0.5, %v2288
        %v2349 = vadd.f32 %v2348, 1.0
        %v2350 = vmul.f32 %v2349, %v2288
        %v2351 = vand.u32 2147483647, %v2288
        %vm2352 = vcmp.lt.f32.partialorder %v2351, 0.0004427343
        %v2353 = vsel %vm2352, %v2350, %v2347
        %v2354 = vadd.f32 %v2290, 1.0
        %v2355 = vlog2.pop %v2354
        %v2356 = vmul.f32 %v2355, 0.6931472
        %v2357 = vmul.f32 -0.5, %v2290
        %v2358 = vadd.f32 %v2357, 1.0
        %v2359 = vmul.f32 %v2358, %v2290
        %v2360 = vand.u32 2147483647, %v2290
        %vm2361 = vcmp.lt.f32.partialorder %v2360, 0.0004427343
        %v2362 = vsel %vm2361, %v2359, %v2356
        %v2363 = vsub.f32 %v2251, %v2299
        %v2364 = vsub.f32 %v2252, %v2308
        %v2365 = vsub.f32 %v2253, %v2317
        %v2366 = vsub.f32 %v2254, %v2326
        %v2367 = vsub.f32 %v2255, %v2335
        %v2368 = vsub.f32 %v2256, %v2344
        %v2369 = vsub.f32 %v2257, %v2353
        %v2370 = vsub.f32 %v2258, %v2362
        %vm2371 = vcmp.lt.s32.totalorder %v2219, 10
        %vm2372 = vcmp.lt.s32.totalorder %v2220, 10
        %vm2373 = vcmp.lt.s32.totalorder %v2221, 10
        %vm2374 = vcmp.lt.s32.totalorder %v2222, 10
        %vm2375 = vcmp.lt.s32.totalorder %v2223, 10
        %vm2376 = vcmp.lt.s32.totalorder %v2224, 10
        %vm2377 = vcmp.lt.s32.totalorder %v2225, 10
        %vm2378 = vcmp.lt.s32.totalorder %v2226, 10
        %v2379 = vsel %vm2371, %v2363, 0.0
        %v2380 = vsel %vm2372, %v2364, 0.0
        %v2381 = vsel %vm2373, %v2365, 0.0
        %v2382 = vsel %vm2374, %v2366, 0.0
        %v2383 = vsel %vm2375, %v2367, 0.0
        %v2384 = vsel %vm2376, %v2368, 0.0
        %v2385 = vsel %vm2377, %v2369, 0.0
        %v2386 = vsel %vm2378, %v2370, 0.0
        %v2387 = vadd.f32 %v2379, 0.0
        %v2388 = vadd.f32 %v2380, 0.0
        %v2389 = vadd.f32 %v2381, 0.0
        %v2390 = vadd.f32 %v2382, 0.0
        %v2391 = vadd.f32 %v2383, 0.0
        %v2392 = vadd.f32 %v2384, 0.0
        %v2393 = vadd.f32 %v2385, 0.0
        %v2394 = vadd.f32 %v2386, 0.0
        %vm2395 = vcmask 1040384
        %v2396 = vsel %vm2395, %v2387, 0.0
        %v2397 = vsel %vm2395, %v2388, 0.0
        %v2398 = vadd.f32 %v2396, %v2397
        %v2399 = vsel %vm2395, %v2389, 0.0
        %v2400 = vadd.f32 %v2398, %v2399
        %v2401 = vsel %vm2395, %v2390, 0.0
        %v2402 = vadd.f32 %v2400, %v2401
        %v2403 = vsel %vm2395, %v2391, 0.0
        %v2404 = vadd.f32 %v2402, %v2403
        %v2405 = vsel %vm2395, %v2392, 0.0
        %v2406 = vadd.f32 %v2404, %v2405
        %v2407 = vsel %vm2395, %v2393, 0.0
        %v2408 = vadd.f32 %v2406, %v2407
        %v2409 = vsel %vm2395, %v2394, 0.0
        %v2410 = vadd.f32 %v2408, %v2409
        %2411 = vadd.xlane.f32.xlu0 %v2410
        %v2412 = vpop.xlane.xlu0 %2411
        %v2413 = vrot.slane %v2412, 4
        %v2414 = vadd.f32 %v2412, %v2413
        %v2415 = vrot.slane %v2414, 2
        %v2416 = vadd.f32 %v2414, %v2415
        %v2417 = vrot.slane %v2416, 1
        %v2418 = vadd.f32 %v2416, %v2417
        %s2419 = vtos %v2418
        %v2420 = vstv %s2419
        %2421 = vst [vmem:[%s228] sm:$0xff] %v2420
        %p2422 = scmp.lt.s32.totalorder %s16, 1
        %s2423 = scalar_select %p2422, %s16, 1
        %s2424 = smul.addr %s2423, 8
        %s2425 = scalar_lea.vmem %s4, %s2424
        // Predicated region
        $region41: #{skipgram_loss.1} parent=35 // pred_check
          %p2426 = pneg %p128
        $region42: #{skipgram_loss.1} parent=35 // pred_check_branch
          %2428 = sbr.rel (%p2426) target = $region44
        $region43: #{skipgram_loss.1} parent=35 // pred_region
          _
        $region44: #{skipgram_loss.1} parent=35 // pred_fallthru
          _
      $region36: #{skipgram_loss.1} parent=5 // pred_fallthru
        _
      %p2429 = scmp.le.s32.totalorder 2, %s11
      // Predicated region
      $region45: #{skipgram_loss.1} parent=5 // pred_check
        %p2430 = pneg %p2429
      $region46: #{skipgram_loss.1} parent=5 // pred_check_branch
        %2432 = sbr.rel (%p2430) target = $region48
      $region47: #{skipgram_loss.1} parent=5 // pred_region
        %s2433 = ssub.s32 %s11, 2
        // Predicated region
        $region49: #{skipgram_loss.1} parent=47 // pred_check
          %p2434 = pneg %p134
        $region50: #{skipgram_loss.1} parent=47 // pred_check_branch
          %2436 = sbr.rel (%p2434) target = $region52
        $region51: #{skipgram_loss.1} parent=47 // pred_region
          %p2437 = scmp.lt.s32.totalorder %s17, 1
          %s2438 = scalar_select %p2437, %s17, 1
          %s2439 = smul.addr %s2438, 8
          %s2440 = scalar_lea.vmem %s4, %s2439
        $region52: #{skipgram_loss.1} parent=47 // pred_fallthru
          _
      $region48: #{skipgram_loss.1} parent=5 // pred_fallthru
        _
    $region6: #{skipgram_loss.1} parent=1 // loop_footer
      %s15 = sadd.s32 1, %s11
    $region7: #{skipgram_loss.1} parent=1 // loop_footer_branch
      %10 = sbr.rel target = $region3
    $region8: #{skipgram_loss.1} parent=1 // loop_exit
      _
    %2441 = vsyncpa [#allocation3], 1
    %s2442 = scalar_lea.sflag [#allocation3], 1
    %2443 = vsyncpa %s2442, 1

</llo_original>
